<compile_context>
chip_gen: v6e
topology: v6e:2x2x1
jax: 0.10.0
libtpu: 0.0.40
codegen_flags: <defaults>
</compile_context>

<pallas_src>
import jax
import jax.numpy as jnp
from jax import lax
from jax.experimental import pallas as pl

B = 2          # batch
N = 32         # graph nodes / EEG channels (matches OutterBAE((32, 32)))
FIN = 16       # per-node EEG feature dim
HID = 64       # args.gnn_hiddens_size -> cat(64, 64) = 128 = mlp_input_size
NUM_LAYERS = 2 # args.gnn_num_layers
EPS_BN = 1e-5
TWO_N = 2 * N  # (graph, node) rows   -> 64
BH = B * HID   # (batch, hid) lanes   -> 128


# ----------------------------------------------------------------------------
# Fused Pallas kernel: both GNNs + MLP head + dtf in one launch, no grid.
# ----------------------------------------------------------------------------
def _mcdis_kernel(x_ref, ap_ref, av_ref, np_ref, nv_ref,
                  w_in_ref, w_hid_ref,
                  w1_ref, b1_ref, s1_ref, t1_ref,
                  w2_ref, b2_ref, s2_ref, t2_ref,
                  w3_ref, b3_ref,
                  out_ref, gnn_ref, dtf_ref):
    f32 = jnp.float32

    # ---- shared input projection, batch folded into LANES ------------------
    xf = x_ref[...]                                            # (B*N, FIN)
    w_in = w_in_ref[...]                                       # (FIN, HID)
    h0 = jnp.concatenate(
        [jnp.dot(xf[b * N:(b + 1) * N], w_in, preferred_element_type=f32)
         for b in range(B)], axis=1)                           # (N, B*HID)

    # ---- assemble (graph,node) x (batch,hid) operands in-kernel ------------
    # rows [0, N)   -> personal graph, rows [N, 2N) -> video graph
    zN = jnp.zeros((N, N), f32)
    a_bd = jnp.concatenate(
        [jnp.concatenate([ap_ref[...], zN], axis=1),
         jnp.concatenate([zN, av_ref[...]], axis=1)], axis=0)  # (2N, 2N)
    node_big = jnp.concatenate(
        [jnp.concatenate([np_ref[...]] * B, axis=1),
         jnp.concatenate([nv_ref[...]] * B, axis=1)], axis=0)  # (2N, B*HID)
    h = jnp.concatenate([h0, h0], axis=0)                      # (2N, B*HID)

    # ---- GNN: both graphs (rows) x both batches (lanes) per matmul ---------
    # TODO(synk): DGCNN.forward_embedding_with_batch is not defined in the
    # provided source; this stand-in does h = ReLU(A @ (h W) [+ node_emb]).
    h = jnp.maximum(
        jnp.dot(a_bd, h, preferred_element_type=f32) + node_big, 0.0)
    for layer in range(NUM_LAYERS - 1):                        # static unroll
        t = jnp.dot(h, w_hid_ref[layer], preferred_element_type=f32)
        h = jnp.maximum(jnp.dot(a_bd, t, preferred_element_type=f32), 0.0)

    # ---- lane-dense combined GNN output + head features --------------------
    # cat([personal, video], dim=2) then max over dim=1 (nodes).
    feat_rows = []
    for b in range(B):
        hp = h[0:N, b * HID:(b + 1) * HID]                     # personal (N,HID)
        hv = h[N:2 * N, b * HID:(b + 1) * HID]                 # video    (N,HID)
        cb = jnp.concatenate([hp, hv], axis=-1)                # (N, 128) lanes
        gnn_ref[b] = cb                                        # full-lane store
        feat_rows.append(jnp.max(cb, axis=0, keepdims=True))   # (1, 128)
    feat = jnp.concatenate(feat_rows, axis=0)                  # (B, 128)

    # ---- MLP head (eval mode: Dropout=identity, BN folded to scale/shift) --
    y = jnp.dot(feat, w1_ref[...], preferred_element_type=f32) + b1_ref[...]
    y = jnp.maximum(y, 0.0) * s1_ref[...] + t1_ref[...]        # ReLU, BN(64)
    y = jnp.dot(y, w2_ref[...], preferred_element_type=f32) + b2_ref[...]
    y = jnp.maximum(y, 0.0) * s2_ref[...] + t2_ref[...]        # ReLU, BN(32)
    out_ref[...] = jnp.dot(y, w3_ref[...],
                           preferred_element_type=f32) + b3_ref[...]

    # ---- dtf stand-in: per-sample normalized gram + tanh (no transpose) ----
    # TODO(synk): `dtf` module is not defined in the provided source.
    inv_fin = 1.0 / FIN
    for b in range(B):
        xb = xf[b * N:(b + 1) * N]                             # (N, FIN)
        g = lax.dot_general(xb, xb, (((1,), (1,)), ((), ())),
                            preferred_element_type=f32) * inv_fin
        dtf_ref[b] = jnp.tanh(g)


def _cost_estimate():
    flops = B * 2 * N * FIN * HID                            # X @ W_in
    flops += NUM_LAYERS * 2 * TWO_N * TWO_N * BH             # A_bd @ h per layer
    flops += (NUM_LAYERS - 1) * 2 * TWO_N * BH * BH          # h @ W_bd
    flops += B * 2 * N * FIN * N                             # dtf grams
    flops += B * 2 * (BH * 64 + 64 * 32 + 32 * 2)            # MLP head
    transcendentals = B * N * N                              # tanh
    bytes_accessed = 4 * (B * N * FIN + 2 * N * N + 2 * N * HID
                          + FIN * HID + (NUM_LAYERS - 1) * BH * BH
                          + BH * 64 + 64 + 64 + 64 + 64 * 32 + 32 + 32 + 32
                          + 32 * 2 + 2
                          + B * 2 + B * N * 2 * HID + B * N * N)
    return pl.CostEstimate(flops=flops, transcendentals=transcendentals,
                           bytes_accessed=bytes_accessed)


def mcdis_fused(eeg, edge_video, node_video, p):
    return pl.pallas_call(
        _mcdis_kernel,
        out_shape=(
            jax.ShapeDtypeStruct((B, 2), jnp.float32),            # MLP logits
            jax.ShapeDtypeStruct((B, N, 2 * HID), jnp.float32),   # [personal|video]
            jax.ShapeDtypeStruct((B, N, N), jnp.float32),         # depersonal graph
        ),
        cost_estimate=_cost_estimate(),
    )(eeg.reshape(B * N, FIN),
      p["pretrain_edge"], edge_video, p["pretrain_node"], node_video,
      p["w_gnn_in"], p["w_gnn_hid_bd"],
      p["w1"], p["b1"], p["bn1_scale"], p["bn1_shift"],
      p["w2"], p["b2"], p["bn2_scale"], p["bn2_shift"],
      p["w3"], p["b3"])


# ----------------------------------------------------------------------------
# Plain-JAX glue
# ----------------------------------------------------------------------------
def outter_bae(video, flow, log, params):
    # TODO(synk): OutterBAE((32, 32)) is not defined in the provided source;
    # synthetic stand-in: global-average-pool video/flow (NCHW), concat with
    # log features, project to a shared (N, N) edge map and (N, HID) node
    # embedding (same role as pretrain_edge / pretrain_node).
    v = jnp.mean(video, axis=(2, 3))                       # (B, Cv)
    f = jnp.mean(flow, axis=(2, 3))                        # (B, Cf)
    feat = jnp.concatenate([v, f, log], axis=-1)           # (B, D)
    feat = jnp.mean(feat, axis=0)                          # (D,)
    edge_expr = jnp.tanh(feat @ params["w_bae_edge"]).reshape(N, N)
    node_expr = jnp.tanh(feat @ params["w_bae_node"]).reshape(N, HID)
    return edge_expr, node_expr


def mcdis_forward(eeg, video, flow, log, params):
    edge_expr, node_expr = outter_bae(video, flow, log, params)
    out, combined, depersonal_graph = mcdis_fused(eeg, edge_expr, node_expr,
                                                  params)
    personal_graph_gnn_out = combined[..., :HID]     # lanes 0..63
    video_graph_gnn_out = combined[..., HID:]        # lanes 64..127
    return out, personal_graph_gnn_out, video_graph_gnn_out, depersonal_graph


def init_params(key):
    ks = jax.random.split(key, 12)
    D_bae = 3 + 2 + 8  # pooled video(3) + flow(2) + log(8) features

    def rnd(k, shape, scale=0.1):
        return jax.random.normal(k, shape, dtype=jnp.float32) * scale

    # Hidden GNN weight, replicated per-batch block-diagonally ONCE at init
    # (batch lives in the lane axis inside the kernel).
    w_hid = rnd(ks[3], (NUM_LAYERS - 1, HID, HID))
    z = jnp.zeros_like(w_hid)
    w_hid_bd = jnp.concatenate(
        [jnp.concatenate([w_hid, z], axis=2),
         jnp.concatenate([z, w_hid], axis=2)], axis=1)      # (L-1, 2H, 2H)

    bn1_scale = jnp.full((1, 64), 1.0 / jnp.sqrt(1.0 + EPS_BN), jnp.float32)
    bn2_scale = jnp.full((1, 32), 1.0 / jnp.sqrt(1.0 + EPS_BN), jnp.float32)
    return {
        "pretrain_edge": rnd(ks[0], (N, N)),
        "pretrain_node": rnd(ks[1], (N, HID)),
        "w_gnn_in": rnd(ks[2], (FIN, HID)),
        "w_gnn_hid_bd": w_hid_bd,
        "w_bae_edge": rnd(ks[4], (D_bae, N * N)),
        "w_bae_node": rnd(ks[5], (D_bae, N * HID)),
        "w1": rnd(ks[6], (2 * HID, 64)),
        "b1": rnd(ks[7], (1, 64), 0.01),
        "w2": rnd(ks[8], (64, 32)),
        "b2": rnd(ks[9], (1, 32), 0.01),
        "w3": rnd(ks[10], (32, 2)),
        "b3": rnd(ks[11], (1, 2), 0.01),
        "bn1_scale": bn1_scale,
        "bn1_shift": jnp.zeros((1, 64), jnp.float32),
        "bn2_scale": bn2_scale,
        "bn2_shift": jnp.zeros((1, 32), jnp.float32),
    }


if __name__ == "__main__":
    key = jax.random.PRNGKey(0)
    k_p, k_eeg, k_vid, k_flow, k_log = jax.random.split(key, 5)

    params = init_params(k_p)
    eeg = jax.random.normal(k_eeg, (B, N, FIN), dtype=jnp.float32)
    video = jax.random.normal(k_vid, (B, 3, 32, 32), dtype=jnp.float32)   # NCHW
    flow = jax.random.normal(k_flow, (B, 2, 32, 32), dtype=jnp.float32)   # NCHW
    log = jax.random.normal(k_log, (B, 8), dtype=jnp.float32)

    out, personal, video_gnn, deperson = jax.jit(mcdis_forward)(
        eeg, video, flow, log, params)
    jax.block_until_ready((out, personal, video_gnn, deperson))

    assert out.shape == (B, 2)
    assert personal.shape == (B, N, HID)
    assert video_gnn.shape == (B, N, HID)
    assert deperson.shape == (B, N, N)
    # check_nan equivalent of the PyTorch forward
    for t in (out, personal, video_gnn, deperson):
        assert not bool(jnp.any(jnp.isnan(t)))
    print("KERNEL_OK")
</pallas_src>

<mosaic_0001>
module attributes {stable_mosaic.version = 11 : i64} {
  func.func @_mcdis_kernel(%arg0: memref<64x16xf32, #tpu.memory_space<vmem>>, %arg1: memref<32x32xf32, #tpu.memory_space<vmem>>, %arg2: memref<32x32xf32, #tpu.memory_space<vmem>>, %arg3: memref<32x64xf32, #tpu.memory_space<vmem>>, %arg4: memref<32x64xf32, #tpu.memory_space<vmem>>, %arg5: memref<16x64xf32, #tpu.memory_space<vmem>>, %arg6: memref<1x128x128xf32, #tpu.memory_space<vmem>>, %arg7: memref<128x64xf32, #tpu.memory_space<vmem>>, %arg8: memref<1x64xf32, #tpu.memory_space<vmem>>, %arg9: memref<1x64xf32, #tpu.memory_space<vmem>>, %arg10: memref<1x64xf32, #tpu.memory_space<vmem>>, %arg11: memref<64x32xf32, #tpu.memory_space<vmem>>, %arg12: memref<1x32xf32, #tpu.memory_space<vmem>>, %arg13: memref<1x32xf32, #tpu.memory_space<vmem>>, %arg14: memref<1x32xf32, #tpu.memory_space<vmem>>, %arg15: memref<32x2xf32, #tpu.memory_space<vmem>>, %arg16: memref<1x2xf32, #tpu.memory_space<vmem>>, %arg17: memref<2x2xf32, #tpu.memory_space<vmem>>, %arg18: memref<2x32x128xf32, #tpu.memory_space<vmem>>, %arg19: memref<2x32x32xf32, #tpu.memory_space<vmem>>) attributes {dimension_semantics = [], scalar_prefetch = 0 : i64, scratch_operands = 0 : i64, tpu.core_type = #tpu.core_type<tc>} {
    %c0 = arith.constant 0 : index
    %c0_0 = arith.constant 0 : index
    %0 = vector.load %arg0[%c0, %c0_0] : memref<64x16xf32, #tpu.memory_space<vmem>>, vector<64x16xf32>
    %c0_1 = arith.constant 0 : index
    %c0_2 = arith.constant 0 : index
    %1 = vector.load %arg5[%c0_1, %c0_2] : memref<16x64xf32, #tpu.memory_space<vmem>>, vector<16x64xf32>
    %2 = vector.extract_strided_slice %0 {offsets = [0, 0], sizes = [32, 16], strides = [1, 1]} : vector<64x16xf32> to vector<32x16xf32>
    %cst = arith.constant dense<0.000000e+00> : vector<32x64xf32>
    %3 = tpu.matmul %2, %1, %cst {dimension_numbers = #tpu.dot_dimension_numbers<[1], [0], [0], [1], [0, 0, 1, 1], [], []>} : vector<32x16xf32>, vector<16x64xf32>, vector<32x64xf32> -> vector<32x64xf32>
    %4 = vector.extract_strided_slice %0 {offsets = [32, 0], sizes = [32, 16], strides = [1, 1]} : vector<64x16xf32> to vector<32x16xf32>
    %cst_3 = arith.constant dense<0.000000e+00> : vector<32x64xf32>
    %5 = tpu.matmul %4, %1, %cst_3 {dimension_numbers = #tpu.dot_dimension_numbers<[1], [0], [0], [1], [0, 0, 1, 1], [], []>} : vector<32x16xf32>, vector<16x64xf32>, vector<32x64xf32> -> vector<32x64xf32>
    %6 = tpu.concatenate %3, %5 in 1 : vector<32x64xf32>, vector<32x64xf32> -> vector<32x128xf32>
    %cst_4 = arith.constant 0.000000e+00 : f32
    %7 = vector.broadcast %cst_4 : f32 to vector<32x32xf32>
    %c0_5 = arith.constant 0 : index
    %c0_6 = arith.constant 0 : index
    %8 = vector.load %arg1[%c0_5, %c0_6] : memref<32x32xf32, #tpu.memory_space<vmem>>, vector<32x32xf32>
    %9 = tpu.concatenate %8, %7 in 1 : vector<32x32xf32>, vector<32x32xf32> -> vector<32x64xf32>
    %c0_7 = arith.constant 0 : index
    %c0_8 = arith.constant 0 : index
    %10 = vector.load %arg2[%c0_7, %c0_8] : memref<32x32xf32, #tpu.memory_space<vmem>>, vector<32x32xf32>
    %11 = tpu.concatenate %7, %10 in 1 : vector<32x32xf32>, vector<32x32xf32> -> vector<32x64xf32>
    %12 = tpu.concatenate %9, %11 in 0 : vector<32x64xf32>, vector<32x64xf32> -> vector<64x64xf32>
    %c0_9 = arith.constant 0 : index
    %c0_10 = arith.constant 0 : index
    %13 = vector.load %arg3[%c0_9, %c0_10] : memref<32x64xf32, #tpu.memory_space<vmem>>, vector<32x64xf32>
    %14 = tpu.concatenate %13, %13 in 1 : vector<32x64xf32>, vector<32x64xf32> -> vector<32x128xf32>
    %c0_11 = arith.constant 0 : index
    %c0_12 = arith.constant 0 : index
    %15 = vector.load %arg4[%c0_11, %c0_12] : memref<32x64xf32, #tpu.memory_space<vmem>>, vector<32x64xf32>
    %16 = tpu.concatenate %15, %15 in 1 : vector<32x64xf32>, vector<32x64xf32> -> vector<32x128xf32>
    %17 = tpu.concatenate %14, %16 in 0 : vector<32x128xf32>, vector<32x128xf32> -> vector<64x128xf32>
    %18 = tpu.concatenate %6, %6 in 0 : vector<32x128xf32>, vector<32x128xf32> -> vector<64x128xf32>
    %cst_13 = arith.constant dense<0.000000e+00> : vector<64x128xf32>
    %19 = tpu.matmul %12, %18, %cst_13 {dimension_numbers = #tpu.dot_dimension_numbers<[1], [0], [0], [1], [0, 0, 1, 1], [], []>} : vector<64x64xf32>, vector<64x128xf32>, vector<64x128xf32> -> vector<64x128xf32>
    %20 = arith.addf %19, %17 : vector<64x128xf32>
    %cst_14 = arith.constant 0.000000e+00 : f32
    %21 = vector.broadcast %cst_14 : f32 to vector<64x128xf32>
    %22 = arith.maximumf %20, %21 : vector<64x128xf32>
    %c0_15 = arith.constant 0 : index
    %c0_16 = arith.constant 0 : index
    %c0_17 = arith.constant 0 : index
    %23 = vector.load %arg6[%c0_15, %c0_16, %c0_17] : memref<1x128x128xf32, #tpu.memory_space<vmem>>, vector<1x128x128xf32>
    %24 = vector.shape_cast %23 : vector<1x128x128xf32> to vector<128x128xf32>
    %cst_18 = arith.constant dense<0.000000e+00> : vector<64x128xf32>
    %25 = tpu.matmul %22, %24, %cst_18 {dimension_numbers = #tpu.dot_dimension_numbers<[1], [0], [0], [1], [0, 0, 1, 1], [], []>} : vector<64x128xf32>, vector<128x128xf32>, vector<64x128xf32> -> vector<64x128xf32>
    %cst_19 = arith.constant dense<0.000000e+00> : vector<64x128xf32>
    %26 = tpu.matmul %12, %25, %cst_19 {dimension_numbers = #tpu.dot_dimension_numbers<[1], [0], [0], [1], [0, 0, 1, 1], [], []>} : vector<64x64xf32>, vector<64x128xf32>, vector<64x128xf32> -> vector<64x128xf32>
    %cst_20 = arith.constant 0.000000e+00 : f32
    %27 = vector.broadcast %cst_20 : f32 to vector<64x128xf32>
    %28 = arith.maximumf %26, %27 : vector<64x128xf32>
    %29 = vector.extract_strided_slice %28 {offsets = [0, 0], sizes = [32, 64], strides = [1, 1]} : vector<64x128xf32> to vector<32x64xf32>
    %30 = vector.extract_strided_slice %28 {offsets = [32, 0], sizes = [32, 64], strides = [1, 1]} : vector<64x128xf32> to vector<32x64xf32>
    %31 = tpu.concatenate %29, %30 in 1 : vector<32x64xf32>, vector<32x64xf32> -> vector<32x128xf32>
    %c0_21 = arith.constant 0 : index
    %c0_22 = arith.constant 0 : index
    %c0_23 = arith.constant 0 : index
    %32 = vector.load %arg18[%c0_21, %c0_22, %c0_23] : memref<2x32x128xf32, #tpu.memory_space<vmem>>, vector<1x32x128xf32>
    %33 = vector.shape_cast %32 : vector<1x32x128xf32> to vector<32x128xf32>
    %34 = vector.shape_cast %31 : vector<32x128xf32> to vector<1x32x128xf32>
    tpu.vector_store %arg18[%c0_21, %c0_22, %c0_23], %34 {strides = array<i32>} : memref<2x32x128xf32, #tpu.memory_space<vmem>>, vector<1x32x128xf32>,
    %cst_24 = arith.constant dense<0xFF800000> : vector<128xf32>
    %35 = vector.multi_reduction <maximumf>, %31, %cst_24 [0] : vector<32x128xf32> to vector<128xf32>
    %36 = vector.shape_cast %35 : vector<128xf32> to vector<1x128xf32>
    %37 = vector.extract_strided_slice %28 {offsets = [0, 64], sizes = [32, 64], strides = [1, 1]} : vector<64x128xf32> to vector<32x64xf32>
    %38 = vector.extract_strided_slice %28 {offsets = [32, 64], sizes = [32, 64], strides = [1, 1]} : vector<64x128xf32> to vector<32x64xf32>
    %39 = tpu.concatenate %37, %38 in 1 : vector<32x64xf32>, vector<32x64xf32> -> vector<32x128xf32>
    %c1 = arith.constant 1 : index
    %c0_25 = arith.constant 0 : index
    %c0_26 = arith.constant 0 : index
    %40 = vector.load %arg18[%c1, %c0_25, %c0_26] : memref<2x32x128xf32, #tpu.memory_space<vmem>>, vector<1x32x128xf32>
    %41 = vector.shape_cast %40 : vector<1x32x128xf32> to vector<32x128xf32>
    %42 = vector.shape_cast %39 : vector<32x128xf32> to vector<1x32x128xf32>
    tpu.vector_store %arg18[%c1, %c0_25, %c0_26], %42 {strides = array<i32>} : memref<2x32x128xf32, #tpu.memory_space<vmem>>, vector<1x32x128xf32>,
    %cst_27 = arith.constant dense<0xFF800000> : vector<128xf32>
    %43 = vector.multi_reduction <maximumf>, %39, %cst_27 [0] : vector<32x128xf32> to vector<128xf32>
    %44 = vector.shape_cast %43 : vector<128xf32> to vector<1x128xf32>
    %45 = tpu.concatenate %36, %44 in 0 : vector<1x128xf32>, vector<1x128xf32> -> vector<2x128xf32>
    %c0_28 = arith.constant 0 : index
    %c0_29 = arith.constant 0 : index
    %46 = vector.load %arg7[%c0_28, %c0_29] : memref<128x64xf32, #tpu.memory_space<vmem>>, vector<128x64xf32>
    %cst_30 = arith.constant dense<0.000000e+00> : vector<2x64xf32>
    %47 = tpu.matmul %45, %46, %cst_30 {dimension_numbers = #tpu.dot_dimension_numbers<[1], [0], [0], [1], [0, 0, 1, 1], [], []>} : vector<2x128xf32>, vector<128x64xf32>, vector<2x64xf32> -> vector<2x64xf32>
    %c0_31 = arith.constant 0 : index
    %c0_32 = arith.constant 0 : index
    %48 = vector.load %arg8[%c0_31, %c0_32] : memref<1x64xf32, #tpu.memory_space<vmem>>, vector<1x64xf32>
    %49 = vector.broadcast %48 : vector<1x64xf32> to vector<2x64xf32>
    %50 = arith.addf %47, %49 : vector<2x64xf32>
    %cst_33 = arith.constant 0.000000e+00 : f32
    %51 = vector.broadcast %cst_33 : f32 to vector<2x64xf32>
    %52 = arith.maximumf %50, %51 : vector<2x64xf32>
    %c0_34 = arith.constant 0 : index
    %c0_35 = arith.constant 0 : index
    %53 = vector.load %arg9[%c0_34, %c0_35] : memref<1x64xf32, #tpu.memory_space<vmem>>, vector<1x64xf32>
    %54 = vector.broadcast %53 : vector<1x64xf32> to vector<2x64xf32>
    %55 = arith.mulf %52, %54 : vector<2x64xf32>
    %c0_36 = arith.constant 0 : index
    %c0_37 = arith.constant 0 : index
    %56 = vector.load %arg10[%c0_36, %c0_37] : memref<1x64xf32, #tpu.memory_space<vmem>>, vector<1x64xf32>
    %57 = vector.broadcast %56 : vector<1x64xf32> to vector<2x64xf32>
    %58 = arith.addf %55, %57 : vector<2x64xf32>
    %c0_38 = arith.constant 0 : index
    %c0_39 = arith.constant 0 : index
    %59 = vector.load %arg11[%c0_38, %c0_39] : memref<64x32xf32, #tpu.memory_space<vmem>>, vector<64x32xf32>
    %cst_40 = arith.constant dense<0.000000e+00> : vector<2x32xf32>
    %60 = tpu.matmul %58, %59, %cst_40 {dimension_numbers = #tpu.dot_dimension_numbers<[1], [0], [0], [1], [0, 0, 1, 1], [], []>} : vector<2x64xf32>, vector<64x32xf32>, vector<2x32xf32> -> vector<2x32xf32>
    %c0_41 = arith.constant 0 : index
    %c0_42 = arith.constant 0 : index
    %61 = vector.load %arg12[%c0_41, %c0_42] : memref<1x32xf32, #tpu.memory_space<vmem>>, vector<1x32xf32>
    %62 = vector.broadcast %61 : vector<1x32xf32> to vector<2x32xf32>
    %63 = arith.addf %60, %62 : vector<2x32xf32>
    %cst_43 = arith.constant 0.000000e+00 : f32
    %64 = vector.broadcast %cst_43 : f32 to vector<2x32xf32>
    %65 = arith.maximumf %63, %64 : vector<2x32xf32>
    %c0_44 = arith.constant 0 : index
    %c0_45 = arith.constant 0 : index
    %66 = vector.load %arg13[%c0_44, %c0_45] : memref<1x32xf32, #tpu.memory_space<vmem>>, vector<1x32xf32>
    %67 = vector.broadcast %66 : vector<1x32xf32> to vector<2x32xf32>
    %68 = arith.mulf %65, %67 : vector<2x32xf32>
    %c0_46 = arith.constant 0 : index
    %c0_47 = arith.constant 0 : index
    %69 = vector.load %arg14[%c0_46, %c0_47] : memref<1x32xf32, #tpu.memory_space<vmem>>, vector<1x32xf32>
    %70 = vector.broadcast %69 : vector<1x32xf32> to vector<2x32xf32>
    %71 = arith.addf %68, %70 : vector<2x32xf32>
    %c0_48 = arith.constant 0 : index
    %c0_49 = arith.constant 0 : index
    %72 = vector.load %arg15[%c0_48, %c0_49] : memref<32x2xf32, #tpu.memory_space<vmem>>, vector<32x2xf32>
    %cst_50 = arith.constant dense<0.000000e+00> : vector<2x2xf32>
    %73 = tpu.matmul %71, %72, %cst_50 {dimension_numbers = #tpu.dot_dimension_numbers<[1], [0], [0], [1], [0, 0, 1, 1], [], []>} : vector<2x32xf32>, vector<32x2xf32>, vector<2x2xf32> -> vector<2x2xf32>
    %c0_51 = arith.constant 0 : index
    %c0_52 = arith.constant 0 : index
    %74 = vector.load %arg16[%c0_51, %c0_52] : memref<1x2xf32, #tpu.memory_space<vmem>>, vector<1x2xf32>
    %75 = vector.broadcast %74 : vector<1x2xf32> to vector<2x2xf32>
    %76 = arith.addf %73, %75 : vector<2x2xf32>
    %c0_53 = arith.constant 0 : index
    %c0_54 = arith.constant 0 : index
    %77 = vector.load %arg17[%c0_53, %c0_54] : memref<2x2xf32, #tpu.memory_space<vmem>>, vector<2x2xf32>
    tpu.vector_store %arg17[%c0_53, %c0_54], %76 {strides = array<i32>} : memref<2x2xf32, #tpu.memory_space<vmem>>, vector<2x2xf32>,
    %78 = vector.extract_strided_slice %0 {offsets = [0, 0], sizes = [32, 16], strides = [1, 1]} : vector<64x16xf32> to vector<32x16xf32>
    %cst_55 = arith.constant dense<0.000000e+00> : vector<32x32xf32>
    %79 = tpu.matmul %78, %78, %cst_55 {dimension_numbers = #tpu.dot_dimension_numbers<[1], [1], [0], [0], [0, 0, 1, 0], [], []>} : vector<32x16xf32>, vector<32x16xf32>, vector<32x32xf32> -> vector<32x32xf32>
    %cst_56 = arith.constant 6.250000e-02 : f32
    %80 = vector.broadcast %cst_56 : f32 to vector<32x32xf32>
    %81 = arith.mulf %79, %80 : vector<32x32xf32>
    %82 = math.tanh %81 : vector<32x32xf32>
    %c0_57 = arith.constant 0 : index
    %c0_58 = arith.constant 0 : index
    %c0_59 = arith.constant 0 : index
    %83 = vector.load %arg19[%c0_57, %c0_58, %c0_59] : memref<2x32x32xf32, #tpu.memory_space<vmem>>, vector<1x32x32xf32>
    %84 = vector.shape_cast %83 : vector<1x32x32xf32> to vector<32x32xf32>
    %85 = vector.shape_cast %82 : vector<32x32xf32> to vector<1x32x32xf32>
    tpu.vector_store %arg19[%c0_57, %c0_58, %c0_59], %85 {strides = array<i32>} : memref<2x32x32xf32, #tpu.memory_space<vmem>>, vector<1x32x32xf32>,
    %86 = vector.extract_strided_slice %0 {offsets = [32, 0], sizes = [32, 16], strides = [1, 1]} : vector<64x16xf32> to vector<32x16xf32>
    %cst_60 = arith.constant dense<0.000000e+00> : vector<32x32xf32>
    %87 = tpu.matmul %86, %86, %cst_60 {dimension_numbers = #tpu.dot_dimension_numbers<[1], [1], [0], [0], [0, 0, 1, 0], [], []>} : vector<32x16xf32>, vector<32x16xf32>, vector<32x32xf32> -> vector<32x32xf32>
    %cst_61 = arith.constant 6.250000e-02 : f32
    %88 = vector.broadcast %cst_61 : f32 to vector<32x32xf32>
    %89 = arith.mulf %87, %88 : vector<32x32xf32>
    %90 = math.tanh %89 : vector<32x32xf32>
    %c1_62 = arith.constant 1 : index
    %c0_63 = arith.constant 0 : index
    %c0_64 = arith.constant 0 : index
    %91 = vector.load %arg19[%c1_62, %c0_63, %c0_64] : memref<2x32x32xf32, #tpu.memory_space<vmem>>, vector<1x32x32xf32>
    %92 = vector.shape_cast %91 : vector<1x32x32xf32> to vector<32x32xf32>
    %93 = vector.shape_cast %90 : vector<32x32xf32> to vector<1x32x32xf32>
    tpu.vector_store %arg19[%c1_62, %c0_63, %c0_64], %93 {strides = array<i32>} : memref<2x32x32xf32, #tpu.memory_space<vmem>>, vector<1x32x32xf32>,
    return
  }
}

</mosaic_0001>

<llo_original>
// kernel: mcdis_forward.1
$region0: #{mcdis_forward.1}
  #allocation0 [shape = 'u32[]', space=smem, size = 0x4, offset = 0x4, fixed_abs, tag = 'smem constant byte address 0x4 - core index']
  #allocation1 [shape = 'u32[144,128]{1,0:T(1,128)}', space=vmem, size = 0x12000, scoped, tag = 'internal scratch']
  %s0 = inlined_call_operand.vmem [shape: f32[64,16], index: 0, kind: input, shape index: {}]
  %s1 = inlined_call_operand.vmem [shape: f32[32,32], index: 1, kind: input, shape index: {}]
  %s2 = inlined_call_operand.vmem [shape: f32[32,32], index: 2, kind: input, shape index: {}]
  %s3 = inlined_call_operand.vmem [shape: f32[32,64], index: 3, kind: input, shape index: {}]
  %s4 = inlined_call_operand.vmem [shape: f32[32,64], index: 4, kind: input, shape index: {}]
  %s5 = inlined_call_operand.vmem [shape: f32[16,64], index: 5, kind: input, shape index: {}]
  %s6 = inlined_call_operand.vmem [shape: f32[1,128,128], index: 6, kind: input, shape index: {}]
  %s7 = inlined_call_operand.vmem [shape: f32[128,64], index: 7, kind: input, shape index: {}]
  %s8 = inlined_call_operand.vmem [shape: f32[1,64], index: 8, kind: input, shape index: {}]
  %s9 = inlined_call_operand.vmem [shape: f32[1,64], index: 9, kind: input, shape index: {}]
  %s10 = inlined_call_operand.vmem [shape: f32[1,64], index: 10, kind: input, shape index: {}]
  %s11 = inlined_call_operand.vmem [shape: f32[64,32], index: 11, kind: input, shape index: {}]
  %s12 = inlined_call_operand.vmem [shape: f32[1,32], index: 12, kind: input, shape index: {}]
  %s13 = inlined_call_operand.vmem [shape: f32[1,32], index: 13, kind: input, shape index: {}]
  %s14 = inlined_call_operand.vmem [shape: f32[1,32], index: 14, kind: input, shape index: {}]
  %s15 = inlined_call_operand.vmem [shape: f32[32,2], index: 15, kind: input, shape index: {}]
  %s16 = inlined_call_operand.vmem [shape: f32[1,2], index: 16, kind: input, shape index: {}]
  %s17 = inlined_call_operand.hbm [shape: f32[2,2], index: 17, kind: output, shape index: {0}]
  %s18 = inlined_call_operand.vmem [shape: f32[2,32,128], index: 18, kind: output, shape index: {1}]
  %s19 = inlined_call_operand.hbm [shape: f32[2,32,32], index: 19, kind: output, shape index: {2}]
  %20 = xla_tuple %s17, %s18, %s19
  %s21 = sld [smem:[#allocation0]]
  $region94: #{mcdis_forward.1} parent=0
    _
  %s23 = ssub.s32 1, %s21
  %s24 = scalar_select 0, %s23, %s21
  $region1: #{mcdis_forward.1} parent=0
    #allocation2 [shape = 'u8[1024]{0}', space=vmem, size = 0x400, scoped, tag = 'output window, operand 0, single buffered']
    #allocation3 [shape = 's32[1]{0}', space=sflag, size = 0x4, scoped, tag = 'scoped memory for mcdis_forward.1']
    #allocation4 [shape = 'u8[32768]{0}', space=vmem, size = 0x8000, scoped, tag = 'output window, operand 2, single buffered']
    #allocation5 [shape = 's32[1]{0}', space=sflag, size = 0x4, scoped, tag = 'scoped memory for mcdis_forward.1']
    %25 = vsyncpa [#allocation3], 0
    %26 = vsyncpa [#allocation5], 0
    // Predicated region
    $region2: #{mcdis_forward.1} parent=1 // pred_check
      _
    $region3: #{mcdis_forward.1} parent=1 // pred_check_branch
      %28 = sbr.rel (0) target = $region5
    $region4: #{mcdis_forward.1} parent=1 // pred_region
      _
    $region5: #{mcdis_forward.1} parent=1 // pred_fallthru
      _
    // Predicated region
    $region6: #{mcdis_forward.1} parent=1 // pred_check
      _
    $region7: #{mcdis_forward.1} parent=1 // pred_check_branch
      %30 = sbr.rel (0) target = $region9
    $region8: #{mcdis_forward.1} parent=1 // pred_region
      _
    $region9: #{mcdis_forward.1} parent=1 // pred_fallthru
      _
    // Predicated region
    $region10: #{mcdis_forward.1} parent=1 // pred_check
      _
    $region11: #{mcdis_forward.1} parent=1 // pred_check_branch
      %32 = sbr.rel (0) target = $region13
    $region12: #{mcdis_forward.1} parent=1 // pred_region
      _
    $region13: #{mcdis_forward.1} parent=1 // pred_fallthru
      _
    // Predicated region
    $region14: #{mcdis_forward.1} parent=1 // pred_check
      _
    $region15: #{mcdis_forward.1} parent=1 // pred_check_branch
      %34 = sbr.rel (0) target = $region17
    $region16: #{mcdis_forward.1} parent=1 // pred_region
      _
    $region17: #{mcdis_forward.1} parent=1 // pred_fallthru
      _
    // Predicated region
    $region18: #{mcdis_forward.1} parent=1 // pred_check
      _
    $region19: #{mcdis_forward.1} parent=1 // pred_check_branch
      %36 = sbr.rel (0) target = $region21
    $region20: #{mcdis_forward.1} parent=1 // pred_region
      _
    $region21: #{mcdis_forward.1} parent=1 // pred_fallthru
      _
    // Predicated region
    $region22: #{mcdis_forward.1} parent=1 // pred_check
      _
    $region23: #{mcdis_forward.1} parent=1 // pred_check_branch
      %38 = sbr.rel (0) target = $region25
    $region24: #{mcdis_forward.1} parent=1 // pred_region
      _
    $region25: #{mcdis_forward.1} parent=1 // pred_fallthru
      _
    // Predicated region
    $region26: #{mcdis_forward.1} parent=1 // pred_check
      _
    $region27: #{mcdis_forward.1} parent=1 // pred_check_branch
      %40 = sbr.rel (0) target = $region29
    $region28: #{mcdis_forward.1} parent=1 // pred_region
      _
    $region29: #{mcdis_forward.1} parent=1 // pred_fallthru
      _
    // Predicated region
    $region30: #{mcdis_forward.1} parent=1 // pred_check
      _
    $region31: #{mcdis_forward.1} parent=1 // pred_check_branch
      %42 = sbr.rel (0) target = $region33
    $region32: #{mcdis_forward.1} parent=1 // pred_region
      _
    $region33: #{mcdis_forward.1} parent=1 // pred_fallthru
      _
    // Predicated region
    $region34: #{mcdis_forward.1} parent=1 // pred_check
      _
    $region35: #{mcdis_forward.1} parent=1 // pred_check_branch
      %44 = sbr.rel (0) target = $region37
    $region36: #{mcdis_forward.1} parent=1 // pred_region
      _
    $region37: #{mcdis_forward.1} parent=1 // pred_fallthru
      _
    // Predicated region
    $region38: #{mcdis_forward.1} parent=1 // pred_check
      _
    $region39: #{mcdis_forward.1} parent=1 // pred_check_branch
      %46 = sbr.rel (0) target = $region41
    $region40: #{mcdis_forward.1} parent=1 // pred_region
      _
    $region41: #{mcdis_forward.1} parent=1 // pred_fallthru
      _
    // Predicated region
    $region42: #{mcdis_forward.1} parent=1 // pred_check
      _
    $region43: #{mcdis_forward.1} parent=1 // pred_check_branch
      %48 = sbr.rel (0) target = $region45
    $region44: #{mcdis_forward.1} parent=1 // pred_region
      _
    $region45: #{mcdis_forward.1} parent=1 // pred_fallthru
      _
    // Predicated region
    $region46: #{mcdis_forward.1} parent=1 // pred_check
      _
    $region47: #{mcdis_forward.1} parent=1 // pred_check_branch
      %50 = sbr.rel (0) target = $region49
    $region48: #{mcdis_forward.1} parent=1 // pred_region
      _
    $region49: #{mcdis_forward.1} parent=1 // pred_fallthru
      _
    // Predicated region
    $region50: #{mcdis_forward.1} parent=1 // pred_check
      _
    $region51: #{mcdis_forward.1} parent=1 // pred_check_branch
      %52 = sbr.rel (0) target = $region53
    $region52: #{mcdis_forward.1} parent=1 // pred_region
      _
    $region53: #{mcdis_forward.1} parent=1 // pred_fallthru
      _
    // Predicated region
    $region54: #{mcdis_forward.1} parent=1 // pred_check
      _
    $region55: #{mcdis_forward.1} parent=1 // pred_check_branch
      %54 = sbr.rel (0) target = $region57
    $region56: #{mcdis_forward.1} parent=1 // pred_region
      _
    $region57: #{mcdis_forward.1} parent=1 // pred_fallthru
      _
    // Predicated region
    $region58: #{mcdis_forward.1} parent=1 // pred_check
      _
    $region59: #{mcdis_forward.1} parent=1 // pred_check_branch
      %56 = sbr.rel (0) target = $region61
    $region60: #{mcdis_forward.1} parent=1 // pred_region
      _
    $region61: #{mcdis_forward.1} parent=1 // pred_fallthru
      _
    // Predicated region
    $region62: #{mcdis_forward.1} parent=1 // pred_check
      _
    $region63: #{mcdis_forward.1} parent=1 // pred_check_branch
      %58 = sbr.rel (0) target = $region65
    $region64: #{mcdis_forward.1} parent=1 // pred_region
      _
    $region65: #{mcdis_forward.1} parent=1 // pred_fallthru
      _
    // Predicated region
    $region66: #{mcdis_forward.1} parent=1 // pred_check
      _
    $region67: #{mcdis_forward.1} parent=1 // pred_check_branch
      %60 = sbr.rel (0) target = $region69
    $region68: #{mcdis_forward.1} parent=1 // pred_region
      _
    $region69: #{mcdis_forward.1} parent=1 // pred_fallthru
      _
    %v61 = vld [vmem:[%s0] sm:$0xff]
    %v62 = vld [vmem:[%s0 + $0x8] sm:$0xff]
    %v63 = vld [vmem:[%s0 + $0x10] sm:$0xff]
    %v64 = vld [vmem:[%s0 + $0x18] sm:$0xff]
    %v65 = vld [vmem:[%s0 + $0x20] sm:$0xff]
    %v66 = vld [vmem:[%s0 + $0x28] sm:$0xff]
    %v67 = vld [vmem:[%s0 + $0x30] sm:$0xff]
    %v68 = vld [vmem:[%s0 + $0x38] sm:$0xff]
    %v69 = vld [vmem:[%s5] sm:$0xff]
    %v70 = vld [vmem:[%s5 + $0x8] sm:$0xff]
    %vm71 = vcmask 130048
    %v73 = vsel %vm71, %v61, 0
    %v76 = vsel %vm71, %v62, 0
    %v79 = vsel %vm71, %v63, 0
    %v82 = vsel %vm71, %v64, 0
    %84 = vmatprep.subr.mxu0 0.0
    %85 = vmatpush1.msra.mxu0 0.0
    %86 = vmatprep.subr.mxu0 0.0
    %87 = vmatpush1.msra.mxu0 0.0
    %88 = vmatprep.subr.mxu0 0.0
    %89 = vmatpush1.msra.mxu0 0.0
    %90 = vmatprep.subr.mxu0 0.0
    %91 = vmatpush1.msra.mxu0 0.0
    %92 = vmatprep.subr.mxu0 0.0
    %93 = vmatpush1.msra.mxu0 0.0
    %94 = vmatprep.subr.mxu0 0.0
    %95 = vmatpush1.msra.mxu0 0.0
    %96 = vmatprep.subr.mxu0 0.0
    %97 = vmatpush1.msra.mxu0 0.0
    %98 = vmatprep.subr.mxu0 0.0
    %99 = vmatpush1.msra.mxu0 0.0
    %100 = vmatprep.subr.mxu0 0.0
    %101 = vmatpush1.msra.mxu0 0.0
    %102 = vmatprep.subr.mxu0 0.0
    %103 = vmatpush1.msra.mxu0 0.0
    %104 = vmatprep.subr.mxu0 0.0
    %105 = vmatpush1.msra.mxu0 0.0
    %106 = vmatprep.subr.mxu0 0.0
    %107 = vmatpush1.msra.mxu0 0.0
    %108 = vmatprep.subr.mxu0 0.0
    %109 = vmatpush1.msra.mxu0 0.0
    %110 = vmatprep.subr.mxu0 0.0
    %111 = vmatpush1.msra.mxu0 0.0
    %112 = vmatprep.subr.mxu0 0.0
    %113 = vmatpush1.msra.mxu0 %v70
    %114 = vmatprep.subr.mxu0 0.0
    %115 = vmatpush1.msra.mxu0 %v69
    %116 = vmatprep.subr.mxu0 0.0
    %117 = vmatpush2.msra.mxu0 0.0
    %118 = vmatprep.subr.mxu0 0.0
    %119 = vmatpush2.msra.mxu0 0.0
    %120 = vmatprep.subr.mxu0 0.0
    %121 = vmatpush2.msra.mxu0 0.0
    %122 = vmatprep.subr.mxu0 0.0
    %123 = vmatpush2.msra.mxu0 0.0
    %124 = vmatprep.subr.mxu0 0.0
    %125 = vmatpush2.msra.mxu0 0.0
    %126 = vmatprep.subr.mxu0 0.0
    %127 = vmatpush2.msra.mxu0 0.0
    %128 = vmatprep.subr.mxu0 0.0
    %129 = vmatpush2.msra.mxu0 0.0
    %130 = vmatprep.subr.mxu0 0.0
    %131 = vmatpush2.msra.mxu0 0.0
    %132 = vmatprep.subr.mxu0 0.0
    %133 = vmatpush2.msra.mxu0 0.0
    %134 = vmatprep.subr.mxu0 0.0
    %135 = vmatpush2.msra.mxu0 0.0
    %136 = vmatprep.subr.mxu0 0.0
    %137 = vmatpush2.msra.mxu0 0.0
    %138 = vmatprep.subr.mxu0 0.0
    %139 = vmatpush2.msra.mxu0 0.0
    %140 = vmatprep.subr.mxu0 0.0
    %141 = vmatpush2.msra.mxu0 0.0
    %142 = vmatprep.subr.mxu0 0.0
    %143 = vmatpush2.msra.mxu0 0.0
    %144 = vmatprep.subr.mxu0 0.0
    %145 = vmatpush2.msra.mxu0 0.0
    %146 = vmatprep.subr.mxu0 0.0
    %147 = vmatpush2.msra.mxu0 0.0
    %148 = vmatprep.mubr.f32.mxu0 0.0
    %149 = vmatmul.mubr.f32.gmra.mxu0 %v73
    %v150 = vpop.f32.mrf.mxu0
    %v151 = vadd.f32 0.0, %v150
    %v152 = vpop.f32.mrf.mxu0
    %153 = vmatprep.mubr.f32.mxu0 0.0
    %154 = vmatmul.mubr.f32.gmra.mxu0 %v76
    %v155 = vpop.f32.mrf.mxu0
    %v156 = vadd.f32 0.0, %v155
    %v157 = vpop.f32.mrf.mxu0
    %158 = vmatprep.mubr.f32.mxu0 0.0
    %159 = vmatmul.mubr.f32.gmra.mxu0 %v79
    %v160 = vpop.f32.mrf.mxu0
    %v161 = vadd.f32 0.0, %v160
    %v162 = vpop.f32.mrf.mxu0
    %163 = vmatprep.mubr.f32.mxu0 0.0
    %164 = vmatmul.mubr.f32.gmra.mxu0 %v82
    %v165 = vpop.f32.mrf.mxu0
    %v166 = vadd.f32 0.0, %v165
    %v167 = vpop.f32.mrf.mxu0
    %168 = vdwg.mxu0
    %v170 = vsel %vm71, %v65, 0
    %v173 = vsel %vm71, %v66, 0
    %v176 = vsel %vm71, %v67, 0
    %v179 = vsel %vm71, %v68, 0
    %181 = vmatprep.subr.mxu0 0.0
    %182 = vmatpush1.msra.mxu0 0.0
    %183 = vmatprep.subr.mxu0 0.0
    %184 = vmatpush1.msra.mxu0 0.0
    %185 = vmatprep.subr.mxu0 0.0
    %186 = vmatpush1.msra.mxu0 0.0
    %187 = vmatprep.subr.mxu0 0.0
    %188 = vmatpush1.msra.mxu0 0.0
    %189 = vmatprep.subr.mxu0 0.0
    %190 = vmatpush1.msra.mxu0 0.0
    %191 = vmatprep.subr.mxu0 0.0
    %192 = vmatpush1.msra.mxu0 0.0
    %193 = vmatprep.subr.mxu0 0.0
    %194 = vmatpush1.msra.mxu0 0.0
    %195 = vmatprep.subr.mxu0 0.0
    %196 = vmatpush1.msra.mxu0 0.0
    %197 = vmatprep.subr.mxu0 0.0
    %198 = vmatpush1.msra.mxu0 0.0
    %199 = vmatprep.subr.mxu0 0.0
    %200 = vmatpush1.msra.mxu0 0.0
    %201 = vmatprep.subr.mxu0 0.0
    %202 = vmatpush1.msra.mxu0 0.0
    %203 = vmatprep.subr.mxu0 0.0
    %204 = vmatpush1.msra.mxu0 0.0
    %205 = vmatprep.subr.mxu0 0.0
    %206 = vmatpush1.msra.mxu0 0.0
    %207 = vmatprep.subr.mxu0 0.0
    %208 = vmatpush1.msra.mxu0 0.0
    %209 = vmatprep.subr.mxu0 0.0
    %210 = vmatpush1.msra.mxu0 %v70
    %211 = vmatprep.subr.mxu0 0.0
    %212 = vmatpush1.msra.mxu0 %v69
    %213 = vmatprep.subr.mxu0 0.0
    %214 = vmatpush2.msra.mxu0 0.0
    %215 = vmatprep.subr.mxu0 0.0
    %216 = vmatpush2.msra.mxu0 0.0
    %217 = vmatprep.subr.mxu0 0.0
    %218 = vmatpush2.msra.mxu0 0.0
    %219 = vmatprep.subr.mxu0 0.0
    %220 = vmatpush2.msra.mxu0 0.0
    %221 = vmatprep.subr.mxu0 0.0
    %222 = vmatpush2.msra.mxu0 0.0
    %223 = vmatprep.subr.mxu0 0.0
    %224 = vmatpush2.msra.mxu0 0.0
    %225 = vmatprep.subr.mxu0 0.0
    %226 = vmatpush2.msra.mxu0 0.0
    %227 = vmatprep.subr.mxu0 0.0
    %228 = vmatpush2.msra.mxu0 0.0
    %229 = vmatprep.subr.mxu0 0.0
    %230 = vmatpush2.msra.mxu0 0.0
    %231 = vmatprep.subr.mxu0 0.0
    %232 = vmatpush2.msra.mxu0 0.0
    %233 = vmatprep.subr.mxu0 0.0
    %234 = vmatpush2.msra.mxu0 0.0
    %235 = vmatprep.subr.mxu0 0.0
    %236 = vmatpush2.msra.mxu0 0.0
    %237 = vmatprep.subr.mxu0 0.0
    %238 = vmatpush2.msra.mxu0 0.0
    %239 = vmatprep.subr.mxu0 0.0
    %240 = vmatpush2.msra.mxu0 0.0
    %241 = vmatprep.subr.mxu0 0.0
    %242 = vmatpush2.msra.mxu0 0.0
    %243 = vmatprep.subr.mxu0 0.0
    %244 = vmatpush2.msra.mxu0 0.0
    %245 = vmatprep.mubr.f32.mxu0 0.0
    %246 = vmatmul.mubr.f32.gmra.mxu0 %v170
    %v247 = vpop.f32.mrf.mxu0
    %v248 = vadd.f32 0.0, %v247
    %v249 = vpop.f32.mrf.mxu0
    %250 = vmatprep.mubr.f32.mxu0 0.0
    %251 = vmatmul.mubr.f32.gmra.mxu0 %v173
    %v252 = vpop.f32.mrf.mxu0
    %v253 = vadd.f32 0.0, %v252
    %v254 = vpop.f32.mrf.mxu0
    %255 = vmatprep.mubr.f32.mxu0 0.0
    %256 = vmatmul.mubr.f32.gmra.mxu0 %v176
    %v257 = vpop.f32.mrf.mxu0
    %v258 = vadd.f32 0.0, %v257
    %v259 = vpop.f32.mrf.mxu0
    %260 = vmatprep.mubr.f32.mxu0 0.0
    %261 = vmatmul.mubr.f32.gmra.mxu0 %v179
    %v262 = vpop.f32.mrf.mxu0
    %v263 = vadd.f32 0.0, %v262
    %v264 = vpop.f32.mrf.mxu0
    %265 = vdwg.mxu0
    %270 = vrot.lane.b32.xlu0 %v248, 64
    %v271 = vpop.permute.xlu0 %270
    %272 = vrot.lane.b32.xlu0 %v253, 64
    %v273 = vpop.permute.xlu0 %272
    %274 = vrot.lane.b32.xlu0 %v258, 64
    %v275 = vpop.permute.xlu0 %274
    %276 = vrot.lane.b32.xlu0 %v263, 64
    %v277 = vpop.permute.xlu0 %276
    %vm282 = vcmask 523264
    %v283 = vsel %vm282, %v151, %v271
    %v284 = vsel %vm282, %v156, %v273
    %v285 = vsel %vm282, %v161, %v275
    %v286 = vsel %vm282, %v166, %v277
    %v287 = vld [vmem:[%s1] sm:$0xff]
    %v288 = vld [vmem:[%s1 + $0x8] sm:$0xff]
    %v289 = vld [vmem:[%s1 + $0x10] sm:$0xff]
    %v290 = vld [vmem:[%s1 + $0x18] sm:$0xff]
    %vm291 = vcmask 261120
    %v292 = vsel %vm291, %v287, 0.0
    %v293 = vsel %vm291, %v288, 0.0
    %v294 = vsel %vm291, %v289, 0.0
    %v295 = vsel %vm291, %v290, 0.0
    %v296 = vld [vmem:[%s2] sm:$0xff]
    %v297 = vld [vmem:[%s2 + $0x8] sm:$0xff]
    %v298 = vld [vmem:[%s2 + $0x10] sm:$0xff]
    %v299 = vld [vmem:[%s2 + $0x18] sm:$0xff]
    %304 = vrot.lane.b32.xlu0 %v296, 32
    %v305 = vpop.permute.xlu0 %304
    %306 = vrot.lane.b32.xlu0 %v297, 32
    %v307 = vpop.permute.xlu0 %306
    %308 = vrot.lane.b32.xlu0 %v298, 32
    %v309 = vpop.permute.xlu0 %308
    %310 = vrot.lane.b32.xlu0 %v299, 32
    %v311 = vpop.permute.xlu0 %310
    %v316 = vsel %vm291, 0.0, %v305
    %v317 = vsel %vm291, 0.0, %v307
    %v318 = vsel %vm291, 0.0, %v309
    %v319 = vsel %vm291, 0.0, %v311
    %v320 = vld [vmem:[%s3] sm:$0xff]
    %v321 = vld [vmem:[%s3 + $0x8] sm:$0xff]
    %v322 = vld [vmem:[%s3 + $0x10] sm:$0xff]
    %v323 = vld [vmem:[%s3 + $0x18] sm:$0xff]
    %328 = vrot.lane.b32.xlu0 %v320, 64
    %v329 = vpop.permute.xlu0 %328
    %330 = vrot.lane.b32.xlu0 %v321, 64
    %v331 = vpop.permute.xlu0 %330
    %332 = vrot.lane.b32.xlu0 %v322, 64
    %v333 = vpop.permute.xlu0 %332
    %334 = vrot.lane.b32.xlu0 %v323, 64
    %v335 = vpop.permute.xlu0 %334
    %v340 = vsel %vm282, %v320, %v329
    %v341 = vsel %vm282, %v321, %v331
    %v342 = vsel %vm282, %v322, %v333
    %v343 = vsel %vm282, %v323, %v335
    %v344 = vld [vmem:[%s4] sm:$0xff]
    %v345 = vld [vmem:[%s4 + $0x8] sm:$0xff]
    %v346 = vld [vmem:[%s4 + $0x10] sm:$0xff]
    %v347 = vld [vmem:[%s4 + $0x18] sm:$0xff]
    %352 = vrot.lane.b32.xlu0 %v344, 64
    %v353 = vpop.permute.xlu0 %352
    %354 = vrot.lane.b32.xlu0 %v345, 64
    %v355 = vpop.permute.xlu0 %354
    %356 = vrot.lane.b32.xlu0 %v346, 64
    %v357 = vpop.permute.xlu0 %356
    %358 = vrot.lane.b32.xlu0 %v347, 64
    %v359 = vpop.permute.xlu0 %358
    %v364 = vsel %vm282, %v344, %v353
    %v365 = vsel %vm282, %v345, %v355
    %v366 = vsel %vm282, %v346, %v357
    %v367 = vsel %vm282, %v347, %v359
    %v369 = vsel %vm282, %v292, 0
    %v372 = vsel %vm282, %v293, 0
    %v375 = vsel %vm282, %v294, 0
    %v378 = vsel %vm282, %v295, 0
    %v381 = vsel %vm282, %v316, 0
    %v384 = vsel %vm282, %v317, 0
    %v387 = vsel %vm282, %v318, 0
    %v390 = vsel %vm282, %v319, 0
    %392 = vmatprep.subr.mxu0 0.0
    %393 = vmatpush1.msra.mxu0 0.0
    %394 = vmatprep.subr.mxu0 0.0
    %395 = vmatpush1.msra.mxu0 0.0
    %396 = vmatprep.subr.mxu0 0.0
    %397 = vmatpush1.msra.mxu0 0.0
    %398 = vmatprep.subr.mxu0 0.0
    %399 = vmatpush1.msra.mxu0 0.0
    %400 = vmatprep.subr.mxu0 0.0
    %401 = vmatpush1.msra.mxu0 0.0
    %402 = vmatprep.subr.mxu0 0.0
    %403 = vmatpush1.msra.mxu0 0.0
    %404 = vmatprep.subr.mxu0 0.0
    %405 = vmatpush1.msra.mxu0 0.0
    %406 = vmatprep.subr.mxu0 0.0
    %407 = vmatpush1.msra.mxu0 0.0
    %408 = vmatprep.subr.mxu0 0.0
    %409 = vmatpush1.msra.mxu0 %v286
    %410 = vmatprep.subr.mxu0 0.0
    %411 = vmatpush1.msra.mxu0 %v285
    %412 = vmatprep.subr.mxu0 0.0
    %413 = vmatpush1.msra.mxu0 %v284
    %414 = vmatprep.subr.mxu0 0.0
    %415 = vmatpush1.msra.mxu0 %v283
    %416 = vmatprep.subr.mxu0 0.0
    %417 = vmatpush1.msra.mxu0 %v286
    %418 = vmatprep.subr.mxu0 0.0
    %419 = vmatpush1.msra.mxu0 %v285
    %420 = vmatprep.subr.mxu0 0.0
    %421 = vmatpush1.msra.mxu0 %v284
    %422 = vmatprep.subr.mxu0 0.0
    %423 = vmatpush1.msra.mxu0 %v283
    %424 = vmatprep.subr.mxu0 0.0
    %425 = vmatpush2.msra.mxu0 0.0
    %426 = vmatprep.subr.mxu0 0.0
    %427 = vmatpush2.msra.mxu0 0.0
    %428 = vmatprep.subr.mxu0 0.0
    %429 = vmatpush2.msra.mxu0 0.0
    %430 = vmatprep.subr.mxu0 0.0
    %431 = vmatpush2.msra.mxu0 0.0
    %432 = vmatprep.subr.mxu0 0.0
    %433 = vmatpush2.msra.mxu0 0.0
    %434 = vmatprep.subr.mxu0 0.0
    %435 = vmatpush2.msra.mxu0 0.0
    %436 = vmatprep.subr.mxu0 0.0
    %437 = vmatpush2.msra.mxu0 0.0
    %438 = vmatprep.subr.mxu0 0.0
    %439 = vmatpush2.msra.mxu0 0.0
    %440 = vmatprep.subr.mxu0 0.0
    %441 = vmatpush2.msra.mxu0 0.0
    %442 = vmatprep.subr.mxu0 0.0
    %443 = vmatpush2.msra.mxu0 0.0
    %444 = vmatprep.subr.mxu0 0.0
    %445 = vmatpush2.msra.mxu0 0.0
    %446 = vmatprep.subr.mxu0 0.0
    %447 = vmatpush2.msra.mxu0 0.0
    %448 = vmatprep.subr.mxu0 0.0
    %449 = vmatpush2.msra.mxu0 0.0
    %450 = vmatprep.subr.mxu0 0.0
    %451 = vmatpush2.msra.mxu0 0.0
    %452 = vmatprep.subr.mxu0 0.0
    %453 = vmatpush2.msra.mxu0 0.0
    %454 = vmatprep.subr.mxu0 0.0
    %455 = vmatpush2.msra.mxu0 0.0
    %456 = vmatprep.mubr.f32.mxu0 0.0
    %457 = vmatmul.mubr.f32.gmra.mxu0 %v369
    %v458 = vpop.f32.mrf.mxu0
    %v459 = vadd.f32 %v340, %v458
    %v460 = vpop.f32.mrf.mxu0
    %461 = vmatprep.mubr.f32.mxu0 0.0
    %462 = vmatmul.mubr.f32.gmra.mxu0 %v372
    %v463 = vpop.f32.mrf.mxu0
    %v464 = vadd.f32 %v341, %v463
    %v465 = vpop.f32.mrf.mxu0
    %466 = vmatprep.mubr.f32.mxu0 0.0
    %467 = vmatmul.mubr.f32.gmra.mxu0 %v375
    %v468 = vpop.f32.mrf.mxu0
    %v469 = vadd.f32 %v342, %v468
    %v470 = vpop.f32.mrf.mxu0
    %471 = vmatprep.mubr.f32.mxu0 0.0
    %472 = vmatmul.mubr.f32.gmra.mxu0 %v378
    %v473 = vpop.f32.mrf.mxu0
    %v474 = vadd.f32 %v343, %v473
    %v475 = vpop.f32.mrf.mxu0
    %476 = vmatprep.mubr.f32.mxu0 0.0
    %477 = vmatmul.mubr.f32.gmra.mxu0 %v381
    %v478 = vpop.f32.mrf.mxu0
    %v479 = vadd.f32 %v364, %v478
    %v480 = vpop.f32.mrf.mxu0
    %481 = vmatprep.mubr.f32.mxu0 0.0
    %482 = vmatmul.mubr.f32.gmra.mxu0 %v384
    %v483 = vpop.f32.mrf.mxu0
    %v484 = vadd.f32 %v365, %v483
    %v485 = vpop.f32.mrf.mxu0
    %486 = vmatprep.mubr.f32.mxu0 0.0
    %487 = vmatmul.mubr.f32.gmra.mxu0 %v387
    %v488 = vpop.f32.mrf.mxu0
    %v489 = vadd.f32 %v366, %v488
    %v490 = vpop.f32.mrf.mxu0
    %491 = vmatprep.mubr.f32.mxu0 0.0
    %492 = vmatmul.mubr.f32.gmra.mxu0 %v390
    %v493 = vpop.f32.mrf.mxu0
    %v494 = vadd.f32 %v367, %v493
    %v495 = vpop.f32.mrf.mxu0
    %496 = vdwg.mxu0
    %v497 = vmax.f32 %v459, 0.0
    %v498 = vmax.f32 %v464, 0.0
    %v499 = vmax.f32 %v469, 0.0
    %v500 = vmax.f32 %v474, 0.0
    %v501 = vmax.f32 %v479, 0.0
    %v502 = vmax.f32 %v484, 0.0
    %v503 = vmax.f32 %v489, 0.0
    %v504 = vmax.f32 %v494, 0.0
    %v505 = vld [vmem:[%s6] sm:$0xff]
    %v506 = vld [vmem:[%s6 + $0x8] sm:$0xff]
    %v507 = vld [vmem:[%s6 + $0x10] sm:$0xff]
    %v508 = vld [vmem:[%s6 + $0x18] sm:$0xff]
    %v509 = vld [vmem:[%s6 + $0x20] sm:$0xff]
    %v510 = vld [vmem:[%s6 + $0x28] sm:$0xff]
    %v511 = vld [vmem:[%s6 + $0x30] sm:$0xff]
    %v512 = vld [vmem:[%s6 + $0x38] sm:$0xff]
    %v513 = vld [vmem:[%s6 + $0x40] sm:$0xff]
    %v514 = vld [vmem:[%s6 + $0x48] sm:$0xff]
    %v515 = vld [vmem:[%s6 + $0x50] sm:$0xff]
    %v516 = vld [vmem:[%s6 + $0x58] sm:$0xff]
    %v517 = vld [vmem:[%s6 + $0x60] sm:$0xff]
    %v518 = vld [vmem:[%s6 + $0x68] sm:$0xff]
    %v519 = vld [vmem:[%s6 + $0x70] sm:$0xff]
    %v520 = vld [vmem:[%s6 + $0x78] sm:$0xff]
    %521 = vmatprep.subr.mxu0 0.0
    %522 = vmatpush1.msra.mxu0 %v520
    %523 = vmatprep.subr.mxu0 0.0
    %524 = vmatpush1.msra.mxu0 %v519
    %525 = vmatprep.subr.mxu0 0.0
    %526 = vmatpush1.msra.mxu0 %v518
    %527 = vmatprep.subr.mxu0 0.0
    %528 = vmatpush1.msra.mxu0 %v517
    %529 = vmatprep.subr.mxu0 0.0
    %530 = vmatpush1.msra.mxu0 %v516
    %531 = vmatprep.subr.mxu0 0.0
    %532 = vmatpush1.msra.mxu0 %v515
    %533 = vmatprep.subr.mxu0 0.0
    %534 = vmatpush1.msra.mxu0 %v514
    %535 = vmatprep.subr.mxu0 0.0
    %536 = vmatpush1.msra.mxu0 %v513
    %537 = vmatprep.subr.mxu0 0.0
    %538 = vmatpush1.msra.mxu0 %v512
    %539 = vmatprep.subr.mxu0 0.0
    %540 = vmatpush1.msra.mxu0 %v511
    %541 = vmatprep.subr.mxu0 0.0
    %542 = vmatpush1.msra.mxu0 %v510
    %543 = vmatprep.subr.mxu0 0.0
    %544 = vmatpush1.msra.mxu0 %v509
    %545 = vmatprep.subr.mxu0 0.0
    %546 = vmatpush1.msra.mxu0 %v508
    %547 = vmatprep.subr.mxu0 0.0
    %548 = vmatpush1.msra.mxu0 %v507
    %549 = vmatprep.subr.mxu0 0.0
    %550 = vmatpush1.msra.mxu0 %v506
    %551 = vmatprep.subr.mxu0 0.0
    %552 = vmatpush1.msra.mxu0 %v505
    %553 = vmatprep.subr.mxu0 0.0
    %554 = vmatpush2.msra.mxu0 0.0
    %555 = vmatprep.subr.mxu0 0.0
    %556 = vmatpush2.msra.mxu0 0.0
    %557 = vmatprep.subr.mxu0 0.0
    %558 = vmatpush2.msra.mxu0 0.0
    %559 = vmatprep.subr.mxu0 0.0
    %560 = vmatpush2.msra.mxu0 0.0
    %561 = vmatprep.subr.mxu0 0.0
    %562 = vmatpush2.msra.mxu0 0.0
    %563 = vmatprep.subr.mxu0 0.0
    %564 = vmatpush2.msra.mxu0 0.0
    %565 = vmatprep.subr.mxu0 0.0
    %566 = vmatpush2.msra.mxu0 0.0
    %567 = vmatprep.subr.mxu0 0.0
    %568 = vmatpush2.msra.mxu0 0.0
    %569 = vmatprep.subr.mxu0 0.0
    %570 = vmatpush2.msra.mxu0 0.0
    %571 = vmatprep.subr.mxu0 0.0
    %572 = vmatpush2.msra.mxu0 0.0
    %573 = vmatprep.subr.mxu0 0.0
    %574 = vmatpush2.msra.mxu0 0.0
    %575 = vmatprep.subr.mxu0 0.0
    %576 = vmatpush2.msra.mxu0 0.0
    %577 = vmatprep.subr.mxu0 0.0
    %578 = vmatpush2.msra.mxu0 0.0
    %579 = vmatprep.subr.mxu0 0.0
    %580 = vmatpush2.msra.mxu0 0.0
    %581 = vmatprep.subr.mxu0 0.0
    %582 = vmatpush2.msra.mxu0 0.0
    %583 = vmatprep.subr.mxu0 0.0
    %584 = vmatpush2.msra.mxu0 0.0
    %585 = vmatprep.mubr.f32.mxu0 0.0
    %586 = vmatmul.mubr.f32.gmra.mxu0 %v497
    %v587 = vpop.f32.mrf.mxu0
    %v588 = vadd.f32 0.0, %v587
    %v589 = vpop.f32.mrf.mxu0
    %590 = vmatprep.mubr.f32.mxu0 0.0
    %591 = vmatmul.mubr.f32.gmra.mxu0 %v498
    %v592 = vpop.f32.mrf.mxu0
    %v593 = vadd.f32 0.0, %v592
    %v594 = vpop.f32.mrf.mxu0
    %595 = vmatprep.mubr.f32.mxu0 0.0
    %596 = vmatmul.mubr.f32.gmra.mxu0 %v499
    %v597 = vpop.f32.mrf.mxu0
    %v598 = vadd.f32 0.0, %v597
    %v599 = vpop.f32.mrf.mxu0
    %600 = vmatprep.mubr.f32.mxu0 0.0
    %601 = vmatmul.mubr.f32.gmra.mxu0 %v500
    %v602 = vpop.f32.mrf.mxu0
    %v603 = vadd.f32 0.0, %v602
    %v604 = vpop.f32.mrf.mxu0
    %605 = vmatprep.mubr.f32.mxu0 0.0
    %606 = vmatmul.mubr.f32.gmra.mxu0 %v501
    %v607 = vpop.f32.mrf.mxu0
    %v608 = vadd.f32 0.0, %v607
    %v609 = vpop.f32.mrf.mxu0
    %610 = vmatprep.mubr.f32.mxu0 0.0
    %611 = vmatmul.mubr.f32.gmra.mxu0 %v502
    %v612 = vpop.f32.mrf.mxu0
    %v613 = vadd.f32 0.0, %v612
    %v614 = vpop.f32.mrf.mxu0
    %615 = vmatprep.mubr.f32.mxu0 0.0
    %616 = vmatmul.mubr.f32.gmra.mxu0 %v503
    %v617 = vpop.f32.mrf.mxu0
    %v618 = vadd.f32 0.0, %v617
    %v619 = vpop.f32.mrf.mxu0
    %620 = vmatprep.mubr.f32.mxu0 0.0
    %621 = vmatmul.mubr.f32.gmra.mxu0 %v504
    %v622 = vpop.f32.mrf.mxu0
    %v623 = vadd.f32 0.0, %v622
    %v624 = vpop.f32.mrf.mxu0
    %625 = vdwg.mxu0
    %626 = vmatprep.subr.mxu0 0.0
    %627 = vmatpush1.msra.mxu0 0.0
    %628 = vmatprep.subr.mxu0 0.0
    %629 = vmatpush1.msra.mxu0 0.0
    %630 = vmatprep.subr.mxu0 0.0
    %631 = vmatpush1.msra.mxu0 0.0
    %632 = vmatprep.subr.mxu0 0.0
    %633 = vmatpush1.msra.mxu0 0.0
    %634 = vmatprep.subr.mxu0 0.0
    %635 = vmatpush1.msra.mxu0 0.0
    %636 = vmatprep.subr.mxu0 0.0
    %637 = vmatpush1.msra.mxu0 0.0
    %638 = vmatprep.subr.mxu0 0.0
    %639 = vmatpush1.msra.mxu0 0.0
    %640 = vmatprep.subr.mxu0 0.0
    %641 = vmatpush1.msra.mxu0 0.0
    %642 = vmatprep.subr.mxu0 0.0
    %643 = vmatpush1.msra.mxu0 %v623
    %644 = vmatprep.subr.mxu0 0.0
    %645 = vmatpush1.msra.mxu0 %v618
    %646 = vmatprep.subr.mxu0 0.0
    %647 = vmatpush1.msra.mxu0 %v613
    %648 = vmatprep.subr.mxu0 0.0
    %649 = vmatpush1.msra.mxu0 %v608
    %650 = vmatprep.subr.mxu0 0.0
    %651 = vmatpush1.msra.mxu0 %v603
    %652 = vmatprep.subr.mxu0 0.0
    %653 = vmatpush1.msra.mxu0 %v598
    %654 = vmatprep.subr.mxu0 0.0
    %655 = vmatpush1.msra.mxu0 %v593
    %656 = vmatprep.subr.mxu0 0.0
    %657 = vmatpush1.msra.mxu0 %v588
    %658 = vmatprep.subr.mxu0 0.0
    %659 = vmatpush2.msra.mxu0 0.0
    %660 = vmatprep.subr.mxu0 0.0
    %661 = vmatpush2.msra.mxu0 0.0
    %662 = vmatprep.subr.mxu0 0.0
    %663 = vmatpush2.msra.mxu0 0.0
    %664 = vmatprep.subr.mxu0 0.0
    %665 = vmatpush2.msra.mxu0 0.0
    %666 = vmatprep.subr.mxu0 0.0
    %667 = vmatpush2.msra.mxu0 0.0
    %668 = vmatprep.subr.mxu0 0.0
    %669 = vmatpush2.msra.mxu0 0.0
    %670 = vmatprep.subr.mxu0 0.0
    %671 = vmatpush2.msra.mxu0 0.0
    %672 = vmatprep.subr.mxu0 0.0
    %673 = vmatpush2.msra.mxu0 0.0
    %674 = vmatprep.subr.mxu0 0.0
    %675 = vmatpush2.msra.mxu0 0.0
    %676 = vmatprep.subr.mxu0 0.0
    %677 = vmatpush2.msra.mxu0 0.0
    %678 = vmatprep.subr.mxu0 0.0
    %679 = vmatpush2.msra.mxu0 0.0
    %680 = vmatprep.subr.mxu0 0.0
    %681 = vmatpush2.msra.mxu0 0.0
    %682 = vmatprep.subr.mxu0 0.0
    %683 = vmatpush2.msra.mxu0 0.0
    %684 = vmatprep.subr.mxu0 0.0
    %685 = vmatpush2.msra.mxu0 0.0
    %686 = vmatprep.subr.mxu0 0.0
    %687 = vmatpush2.msra.mxu0 0.0
    %688 = vmatprep.subr.mxu0 0.0
    %689 = vmatpush2.msra.mxu0 0.0
    %690 = vmatprep.mubr.f32.mxu0 0.0
    %691 = vmatmul.mubr.f32.gmra.mxu0 %v369
    %v692 = vpop.f32.mrf.mxu0
    %v693 = vadd.f32 0.0, %v692
    %v694 = vpop.f32.mrf.mxu0
    %695 = vmatprep.mubr.f32.mxu0 0.0
    %696 = vmatmul.mubr.f32.gmra.mxu0 %v372
    %v697 = vpop.f32.mrf.mxu0
    %v698 = vadd.f32 0.0, %v697
    %v699 = vpop.f32.mrf.mxu0
    %700 = vmatprep.mubr.f32.mxu0 0.0
    %701 = vmatmul.mubr.f32.gmra.mxu0 %v375
    %v702 = vpop.f32.mrf.mxu0
    %v703 = vadd.f32 0.0, %v702
    %v704 = vpop.f32.mrf.mxu0
    %705 = vmatprep.mubr.f32.mxu0 0.0
    %706 = vmatmul.mubr.f32.gmra.mxu0 %v378
    %v707 = vpop.f32.mrf.mxu0
    %v708 = vadd.f32 0.0, %v707
    %v709 = vpop.f32.mrf.mxu0
    %710 = vmatprep.mubr.f32.mxu0 0.0
    %711 = vmatmul.mubr.f32.gmra.mxu0 %v381
    %v712 = vpop.f32.mrf.mxu0
    %v713 = vadd.f32 0.0, %v712
    %v714 = vpop.f32.mrf.mxu0
    %715 = vmatprep.mubr.f32.mxu0 0.0
    %716 = vmatmul.mubr.f32.gmra.mxu0 %v384
    %v717 = vpop.f32.mrf.mxu0
    %v718 = vadd.f32 0.0, %v717
    %v719 = vpop.f32.mrf.mxu0
    %720 = vmatprep.mubr.f32.mxu0 0.0
    %721 = vmatmul.mubr.f32.gmra.mxu0 %v387
    %v722 = vpop.f32.mrf.mxu0
    %v723 = vadd.f32 0.0, %v722
    %v724 = vpop.f32.mrf.mxu0
    %725 = vmatprep.mubr.f32.mxu0 0.0
    %726 = vmatmul.mubr.f32.gmra.mxu0 %v390
    %v727 = vpop.f32.mrf.mxu0
    %v728 = vadd.f32 0.0, %v727
    %v729 = vpop.f32.mrf.mxu0
    %730 = vdwg.mxu0
    %v731 = vmax.f32 %v693, 0.0
    %v732 = vmax.f32 %v698, 0.0
    %v733 = vmax.f32 %v703, 0.0
    %v734 = vmax.f32 %v708, 0.0
    %v735 = vmax.f32 %v713, 0.0
    %v736 = vmax.f32 %v718, 0.0
    %v737 = vmax.f32 %v723, 0.0
    %v738 = vmax.f32 %v728, 0.0
    %743 = vrot.lane.b32.xlu0 %v735, 64
    %v744 = vpop.permute.xlu0 %743
    %745 = vrot.lane.b32.xlu0 %v736, 64
    %v746 = vpop.permute.xlu0 %745
    %747 = vrot.lane.b32.xlu0 %v737, 64
    %v748 = vpop.permute.xlu0 %747
    %749 = vrot.lane.b32.xlu0 %v738, 64
    %v750 = vpop.permute.xlu0 %749
    %v755 = vsel %vm282, %v731, %v744
    %v756 = vsel %vm282, %v732, %v746
    %v757 = vsel %vm282, %v733, %v748
    %v758 = vsel %vm282, %v734, %v750
    %759 = vst [vmem:[%s18] sm:$0xff] %v755
    %760 = vst [vmem:[%s18 + $0x8] sm:$0xff] %v756
    %761 = vst [vmem:[%s18 + $0x10] sm:$0xff] %v757
    %762 = vst [vmem:[%s18 + $0x18] sm:$0xff] %v758
    %v763 = vmax.f32 %v755, %v756
    %v764 = vmax.f32 %v757, %v758
    %v765 = vmax.f32 %v763, %v764
    %v766 = vrot.slane %v765, 4
    %v767 = vmax.f32 %v765, %v766
    %v768 = vrot.slane %v767, 2
    %v769 = vmax.f32 %v767, %v768
    %v770 = vrot.slane %v769, 1
    %v771 = vmax.f32 %v769, %v770
    %776 = vrot.lane.b32.xlu0 %v731, 64
    %v777 = vpop.permute.xlu0 %776
    %778 = vrot.lane.b32.xlu0 %v732, 64
    %v779 = vpop.permute.xlu0 %778
    %780 = vrot.lane.b32.xlu0 %v733, 64
    %v781 = vpop.permute.xlu0 %780
    %782 = vrot.lane.b32.xlu0 %v734, 64
    %v783 = vpop.permute.xlu0 %782
    %v788 = vsel %vm282, %v777, %v735
    %v789 = vsel %vm282, %v779, %v736
    %v790 = vsel %vm282, %v781, %v737
    %v791 = vsel %vm282, %v783, %v738
    %s792 = scalar_lea.vmem %s18, 32
    %793 = vst [vmem:[%s792] sm:$0xff] %v788
    %794 = vst [vmem:[%s792 + $0x8] sm:$0xff] %v789
    %795 = vst [vmem:[%s792 + $0x10] sm:$0xff] %v790
    %796 = vst [vmem:[%s792 + $0x18] sm:$0xff] %v791
    %v797 = vmax.f32 %v788, %v789
    %v798 = vmax.f32 %v790, %v791
    %v799 = vmax.f32 %v797, %v798
    %v800 = vrot.slane %v799, 4
    %v801 = vmax.f32 %v799, %v800
    %v802 = vrot.slane %v801, 2
    %v803 = vmax.f32 %v801, %v802
    %v804 = vrot.slane %v803, 1
    %v805 = vmax.f32 %v803, %v804
    %vm806 = vcmask 1040384
    %v807 = vsel %vm806, %v771, %v805
    %v808 = vld [vmem:[%s7] sm:$0xff]
    %v809 = vld [vmem:[%s7 + $0x8] sm:$0xff]
    %v810 = vld [vmem:[%s7 + $0x10] sm:$0xff]
    %v811 = vld [vmem:[%s7 + $0x18] sm:$0xff]
    %v812 = vld [vmem:[%s7 + $0x20] sm:$0xff]
    %v813 = vld [vmem:[%s7 + $0x28] sm:$0xff]
    %v814 = vld [vmem:[%s7 + $0x30] sm:$0xff]
    %v815 = vld [vmem:[%s7 + $0x38] sm:$0xff]
    %v816 = vld [vmem:[%s7 + $0x40] sm:$0xff]
    %v817 = vld [vmem:[%s7 + $0x48] sm:$0xff]
    %v818 = vld [vmem:[%s7 + $0x50] sm:$0xff]
    %v819 = vld [vmem:[%s7 + $0x58] sm:$0xff]
    %v820 = vld [vmem:[%s7 + $0x60] sm:$0xff]
    %v821 = vld [vmem:[%s7 + $0x68] sm:$0xff]
    %v822 = vld [vmem:[%s7 + $0x70] sm:$0xff]
    %v823 = vld [vmem:[%s7 + $0x78] sm:$0xff]
    %v824 = vld [vmem:[%s8] sm:$0x1]
    %v826 = vlaneseq
    %v827 = vshrl.u32 %v826, 7
    %v828 = vsub.s32 0, %v827
    %v829 = vrot.slane %v824, %v828
    %831 = vmatprep.subr.mxu0 0.0
    %832 = vmatpush1.msra.mxu0 %v823
    %833 = vmatprep.subr.mxu0 0.0
    %834 = vmatpush1.msra.mxu0 %v822
    %835 = vmatprep.subr.mxu0 0.0
    %836 = vmatpush1.msra.mxu0 %v821
    %837 = vmatprep.subr.mxu0 0.0
    %838 = vmatpush1.msra.mxu0 %v820
    %839 = vmatprep.subr.mxu0 0.0
    %840 = vmatpush1.msra.mxu0 %v819
    %841 = vmatprep.subr.mxu0 0.0
    %842 = vmatpush1.msra.mxu0 %v818
    %843 = vmatprep.subr.mxu0 0.0
    %844 = vmatpush1.msra.mxu0 %v817
    %845 = vmatprep.subr.mxu0 0.0
    %846 = vmatpush1.msra.mxu0 %v816
    %847 = vmatprep.subr.mxu0 0.0
    %848 = vmatpush1.msra.mxu0 %v815
    %849 = vmatprep.subr.mxu0 0.0
    %850 = vmatpush1.msra.mxu0 %v814
    %851 = vmatprep.subr.mxu0 0.0
    %852 = vmatpush1.msra.mxu0 %v813
    %853 = vmatprep.subr.mxu0 0.0
    %854 = vmatpush1.msra.mxu0 %v812
    %855 = vmatprep.subr.mxu0 0.0
    %856 = vmatpush1.msra.mxu0 %v811
    %857 = vmatprep.subr.mxu0 0.0
    %858 = vmatpush1.msra.mxu0 %v810
    %859 = vmatprep.subr.mxu0 0.0
    %860 = vmatpush1.msra.mxu0 %v809
    %861 = vmatprep.subr.mxu0 0.0
    %862 = vmatpush1.msra.mxu0 %v808
    %863 = vmatprep.subr.mxu0 0.0
    %864 = vmatpush2.msra.mxu0 0.0
    %865 = vmatprep.subr.mxu0 0.0
    %866 = vmatpush2.msra.mxu0 0.0
    %867 = vmatprep.subr.mxu0 0.0
    %868 = vmatpush2.msra.mxu0 0.0
    %869 = vmatprep.subr.mxu0 0.0
    %870 = vmatpush2.msra.mxu0 0.0
    %871 = vmatprep.subr.mxu0 0.0
    %872 = vmatpush2.msra.mxu0 0.0
    %873 = vmatprep.subr.mxu0 0.0
    %874 = vmatpush2.msra.mxu0 0.0
    %875 = vmatprep.subr.mxu0 0.0
    %876 = vmatpush2.msra.mxu0 0.0
    %877 = vmatprep.subr.mxu0 0.0
    %878 = vmatpush2.msra.mxu0 0.0
    %879 = vmatprep.subr.mxu0 0.0
    %880 = vmatpush2.msra.mxu0 0.0
    %881 = vmatprep.subr.mxu0 0.0
    %882 = vmatpush2.msra.mxu0 0.0
    %883 = vmatprep.subr.mxu0 0.0
    %884 = vmatpush2.msra.mxu0 0.0
    %885 = vmatprep.subr.mxu0 0.0
    %886 = vmatpush2.msra.mxu0 0.0
    %887 = vmatprep.subr.mxu0 0.0
    %888 = vmatpush2.msra.mxu0 0.0
    %889 = vmatprep.subr.mxu0 0.0
    %890 = vmatpush2.msra.mxu0 0.0
    %891 = vmatprep.subr.mxu0 0.0
    %892 = vmatpush2.msra.mxu0 0.0
    %893 = vmatprep.subr.mxu0 0.0
    %894 = vmatpush2.msra.mxu0 0.0
    %895 = vmatprep.mubr.f32.mxu0 0.0
    %896 = vmatmul.mubr.f32.gmra.mxu0 %v807
    %v897 = vpop.f32.mrf.mxu0
    %v898 = vadd.f32 %v829, %v897
    %v899 = vpop.f32.mrf.mxu0
    %900 = vdwg.mxu0
    %v901 = vmax.f32 %v898, 0.0
    %v902 = vld [vmem:[%s9] sm:$0x1]
    %v904 = vlaneseq
    %v905 = vshrl.u32 %v904, 7
    %v906 = vsub.s32 0, %v905
    %v907 = vrot.slane %v902, %v906
    %v909 = vmul.f32 %v901, %v907
    %v910 = vld [vmem:[%s10] sm:$0x1]
    %v912 = vlaneseq
    %v913 = vshrl.u32 %v912, 7
    %v914 = vsub.s32 0, %v913
    %v915 = vrot.slane %v910, %v914
    %v917 = vadd.f32 %v909, %v915
    %v918 = vld [vmem:[%s11] sm:$0xff]
    %v919 = vld [vmem:[%s11 + $0x8] sm:$0xff]
    %v920 = vld [vmem:[%s11 + $0x10] sm:$0xff]
    %v921 = vld [vmem:[%s11 + $0x18] sm:$0xff]
    %v922 = vld [vmem:[%s11 + $0x20] sm:$0xff]
    %v923 = vld [vmem:[%s11 + $0x28] sm:$0xff]
    %v924 = vld [vmem:[%s11 + $0x30] sm:$0xff]
    %v925 = vld [vmem:[%s11 + $0x38] sm:$0xff]
    %v926 = vld [vmem:[%s12] sm:$0x1]
    %v928 = vlaneseq
    %v929 = vshrl.u32 %v928, 7
    %v930 = vsub.s32 0, %v929
    %v931 = vrot.slane %v926, %v930
    %v934 = vsel %vm282, %v917, 0
    %936 = vmatprep.subr.mxu0 0.0
    %937 = vmatpush1.msra.mxu0 0.0
    %938 = vmatprep.subr.mxu0 0.0
    %939 = vmatpush1.msra.mxu0 0.0
    %940 = vmatprep.subr.mxu0 0.0
    %941 = vmatpush1.msra.mxu0 0.0
    %942 = vmatprep.subr.mxu0 0.0
    %943 = vmatpush1.msra.mxu0 0.0
    %944 = vmatprep.subr.mxu0 0.0
    %945 = vmatpush1.msra.mxu0 0.0
    %946 = vmatprep.subr.mxu0 0.0
    %947 = vmatpush1.msra.mxu0 0.0
    %948 = vmatprep.subr.mxu0 0.0
    %949 = vmatpush1.msra.mxu0 0.0
    %950 = vmatprep.subr.mxu0 0.0
    %951 = vmatpush1.msra.mxu0 0.0
    %952 = vmatprep.subr.mxu0 0.0
    %953 = vmatpush1.msra.mxu0 %v925
    %954 = vmatprep.subr.mxu0 0.0
    %955 = vmatpush1.msra.mxu0 %v924
    %956 = vmatprep.subr.mxu0 0.0
    %957 = vmatpush1.msra.mxu0 %v923
    %958 = vmatprep.subr.mxu0 0.0
    %959 = vmatpush1.msra.mxu0 %v922
    %960 = vmatprep.subr.mxu0 0.0
    %961 = vmatpush1.msra.mxu0 %v921
    %962 = vmatprep.subr.mxu0 0.0
    %963 = vmatpush1.msra.mxu0 %v920
    %964 = vmatprep.subr.mxu0 0.0
    %965 = vmatpush1.msra.mxu0 %v919
    %966 = vmatprep.subr.mxu0 0.0
    %967 = vmatpush1.msra.mxu0 %v918
    %968 = vmatprep.subr.mxu0 0.0
    %969 = vmatpush2.msra.mxu0 0.0
    %970 = vmatprep.subr.mxu0 0.0
    %971 = vmatpush2.msra.mxu0 0.0
    %972 = vmatprep.subr.mxu0 0.0
    %973 = vmatpush2.msra.mxu0 0.0
    %974 = vmatprep.subr.mxu0 0.0
    %975 = vmatpush2.msra.mxu0 0.0
    %976 = vmatprep.subr.mxu0 0.0
    %977 = vmatpush2.msra.mxu0 0.0
    %978 = vmatprep.subr.mxu0 0.0
    %979 = vmatpush2.msra.mxu0 0.0
    %980 = vmatprep.subr.mxu0 0.0
    %981 = vmatpush2.msra.mxu0 0.0
    %982 = vmatprep.subr.mxu0 0.0
    %983 = vmatpush2.msra.mxu0 0.0
    %984 = vmatprep.subr.mxu0 0.0
    %985 = vmatpush2.msra.mxu0 0.0
    %986 = vmatprep.subr.mxu0 0.0
    %987 = vmatpush2.msra.mxu0 0.0
    %988 = vmatprep.subr.mxu0 0.0
    %989 = vmatpush2.msra.mxu0 0.0
    %990 = vmatprep.subr.mxu0 0.0
    %991 = vmatpush2.msra.mxu0 0.0
    %992 = vmatprep.subr.mxu0 0.0
    %993 = vmatpush2.msra.mxu0 0.0
    %994 = vmatprep.subr.mxu0 0.0
    %995 = vmatpush2.msra.mxu0 0.0
    %996 = vmatprep.subr.mxu0 0.0
    %997 = vmatpush2.msra.mxu0 0.0
    %998 = vmatprep.subr.mxu0 0.0
    %999 = vmatpush2.msra.mxu0 0.0
    %1000 = vmatprep.mubr.f32.mxu0 0.0
    %1001 = vmatmul.mubr.f32.gmra.mxu0 %v934
    %v1002 = vpop.f32.mrf.mxu0
    %v1003 = vadd.f32 %v931, %v1002
    %v1004 = vpop.f32.mrf.mxu0
    %1005 = vdwg.mxu0
    %v1006 = vmax.f32 %v1003, 0.0
    %v1007 = vld [vmem:[%s13] sm:$0x1]
    %v1009 = vlaneseq
    %v1010 = vshrl.u32 %v1009, 7
    %v1011 = vsub.s32 0, %v1010
    %v1012 = vrot.slane %v1007, %v1011
    %v1014 = vmul.f32 %v1006, %v1012
    %v1015 = vld [vmem:[%s14] sm:$0x1]
    %v1017 = vlaneseq
    %v1018 = vshrl.u32 %v1017, 7
    %v1019 = vsub.s32 0, %v1018
    %v1020 = vrot.slane %v1015, %v1019
    %v1022 = vadd.f32 %v1014, %v1020
    %v1023 = vld [vmem:[%s15] sm:$0xff]
    %v1024 = vld [vmem:[%s15 + $0x8] sm:$0xff]
    %v1025 = vld [vmem:[%s15 + $0x10] sm:$0xff]
    %v1026 = vld [vmem:[%s15 + $0x18] sm:$0xff]
    %v1027 = vld [vmem:[%s16] sm:$0x1]
    %v1029 = vlaneseq
    %v1030 = vshrl.u32 %v1029, 7
    %v1031 = vsub.s32 0, %v1030
    %v1032 = vrot.slane %v1027, %v1031
    %v1035 = vsel %vm291, %v1022, 0
    %1037 = vmatprep.subr.mxu0 0.0
    %1038 = vmatpush1.msra.mxu0 0.0
    %1039 = vmatprep.subr.mxu0 0.0
    %1040 = vmatpush1.msra.mxu0 0.0
    %1041 = vmatprep.subr.mxu0 0.0
    %1042 = vmatpush1.msra.mxu0 0.0
    %1043 = vmatprep.subr.mxu0 0.0
    %1044 = vmatpush1.msra.mxu0 0.0
    %1045 = vmatprep.subr.mxu0 0.0
    %1046 = vmatpush1.msra.mxu0 0.0
    %1047 = vmatprep.subr.mxu0 0.0
    %1048 = vmatpush1.msra.mxu0 0.0
    %1049 = vmatprep.subr.mxu0 0.0
    %1050 = vmatpush1.msra.mxu0 0.0
    %1051 = vmatprep.subr.mxu0 0.0
    %1052 = vmatpush1.msra.mxu0 0.0
    %1053 = vmatprep.subr.mxu0 0.0
    %1054 = vmatpush1.msra.mxu0 0.0
    %1055 = vmatprep.subr.mxu0 0.0
    %1056 = vmatpush1.msra.mxu0 0.0
    %1057 = vmatprep.subr.mxu0 0.0
    %1058 = vmatpush1.msra.mxu0 0.0
    %1059 = vmatprep.subr.mxu0 0.0
    %1060 = vmatpush1.msra.mxu0 0.0
    %1061 = vmatprep.subr.mxu0 0.0
    %1062 = vmatpush1.msra.mxu0 %v1026
    %1063 = vmatprep.subr.mxu0 0.0
    %1064 = vmatpush1.msra.mxu0 %v1025
    %1065 = vmatprep.subr.mxu0 0.0
    %1066 = vmatpush1.msra.mxu0 %v1024
    %1067 = vmatprep.subr.mxu0 0.0
    %1068 = vmatpush1.msra.mxu0 %v1023
    %1069 = vmatprep.subr.mxu0 0.0
    %1070 = vmatpush2.msra.mxu0 0.0
    %1071 = vmatprep.subr.mxu0 0.0
    %1072 = vmatpush2.msra.mxu0 0.0
    %1073 = vmatprep.subr.mxu0 0.0
    %1074 = vmatpush2.msra.mxu0 0.0
    %1075 = vmatprep.subr.mxu0 0.0
    %1076 = vmatpush2.msra.mxu0 0.0
    %1077 = vmatprep.subr.mxu0 0.0
    %1078 = vmatpush2.msra.mxu0 0.0
    %1079 = vmatprep.subr.mxu0 0.0
    %1080 = vmatpush2.msra.mxu0 0.0
    %1081 = vmatprep.subr.mxu0 0.0
    %1082 = vmatpush2.msra.mxu0 0.0
    %1083 = vmatprep.subr.mxu0 0.0
    %1084 = vmatpush2.msra.mxu0 0.0
    %1085 = vmatprep.subr.mxu0 0.0
    %1086 = vmatpush2.msra.mxu0 0.0
    %1087 = vmatprep.subr.mxu0 0.0
    %1088 = vmatpush2.msra.mxu0 0.0
    %1089 = vmatprep.subr.mxu0 0.0
    %1090 = vmatpush2.msra.mxu0 0.0
    %1091 = vmatprep.subr.mxu0 0.0
    %1092 = vmatpush2.msra.mxu0 0.0
    %1093 = vmatprep.subr.mxu0 0.0
    %1094 = vmatpush2.msra.mxu0 0.0
    %1095 = vmatprep.subr.mxu0 0.0
    %1096 = vmatpush2.msra.mxu0 0.0
    %1097 = vmatprep.subr.mxu0 0.0
    %1098 = vmatpush2.msra.mxu0 0.0
    %1099 = vmatprep.subr.mxu0 0.0
    %1100 = vmatpush2.msra.mxu0 0.0
    %1101 = vmatprep.mubr.f32.mxu0 0.0
    %1102 = vmatmul.mubr.f32.gmra.mxu0 %v1035
    %v1103 = vpop.f32.mrf.mxu0
    %v1104 = vadd.f32 %v1032, %v1103
    %v1105 = vpop.f32.mrf.mxu0
    %1106 = vdwg.mxu0
    %vm1107 = vcmask 9216
    %1108 = vst.msk [vmem:[#allocation2] sm:$0x3] %vm1107, %v1104
    %1109 = vmatprep.subr.mxu0 0.0
    %1110 = vmatpush1.xpose.msra.mxu0 0.0
    %1111 = vmatprep.subr.mxu0 0.0
    %1112 = vmatpush1.xpose.msra.mxu0 0.0
    %1113 = vmatprep.subr.mxu0 0.0
    %1114 = vmatpush1.xpose.msra.mxu0 0.0
    %1115 = vmatprep.subr.mxu0 0.0
    %1116 = vmatpush1.xpose.msra.mxu0 0.0
    %1117 = vmatprep.subr.mxu0 0.0
    %1118 = vmatpush1.xpose.msra.mxu0 0.0
    %1119 = vmatprep.subr.mxu0 0.0
    %1120 = vmatpush1.xpose.msra.mxu0 0.0
    %1121 = vmatprep.subr.mxu0 0.0
    %1122 = vmatpush1.xpose.msra.mxu0 0.0
    %1123 = vmatprep.subr.mxu0 0.0
    %1124 = vmatpush1.xpose.msra.mxu0 0.0
    %1125 = vmatprep.subr.mxu0 0.0
    %1126 = vmatpush1.xpose.msra.mxu0 0.0
    %1127 = vmatprep.subr.mxu0 0.0
    %1128 = vmatpush1.xpose.msra.mxu0 0.0
    %1129 = vmatprep.subr.mxu0 0.0
    %1130 = vmatpush1.xpose.msra.mxu0 0.0
    %1131 = vmatprep.subr.mxu0 0.0
    %1132 = vmatpush1.xpose.msra.mxu0 0.0
    %1133 = vmatprep.subr.mxu0 0.0
    %1134 = vmatpush1.xpose.msra.mxu0 %v82
    %1135 = vmatprep.subr.mxu0 0.0
    %1136 = vmatpush1.xpose.msra.mxu0 %v79
    %1137 = vmatprep.subr.mxu0 0.0
    %1138 = vmatpush1.xpose.msra.mxu0 %v76
    %1139 = vmatprep.subr.mxu0 0.0
    %1140 = vmatpush1.xpose.msra.mxu0 %v73
    %1141 = vmatprep.subr.mxu0 0.0
    %1142 = vmatpush2.xpose.msra.mxu0 0.0
    %1143 = vmatprep.subr.mxu0 0.0
    %1144 = vmatpush2.xpose.msra.mxu0 0.0
    %1145 = vmatprep.subr.mxu0 0.0
    %1146 = vmatpush2.xpose.msra.mxu0 0.0
    %1147 = vmatprep.subr.mxu0 0.0
    %1148 = vmatpush2.xpose.msra.mxu0 0.0
    %1149 = vmatprep.subr.mxu0 0.0
    %1150 = vmatpush2.xpose.msra.mxu0 0.0
    %1151 = vmatprep.subr.mxu0 0.0
    %1152 = vmatpush2.xpose.msra.mxu0 0.0
    %1153 = vmatprep.subr.mxu0 0.0
    %1154 = vmatpush2.xpose.msra.mxu0 0.0
    %1155 = vmatprep.subr.mxu0 0.0
    %1156 = vmatpush2.xpose.msra.mxu0 0.0
    %1157 = vmatprep.subr.mxu0 0.0
    %1158 = vmatpush2.xpose.msra.mxu0 0.0
    %1159 = vmatprep.subr.mxu0 0.0
    %1160 = vmatpush2.xpose.msra.mxu0 0.0
    %1161 = vmatprep.subr.mxu0 0.0
    %1162 = vmatpush2.xpose.msra.mxu0 0.0
    %1163 = vmatprep.subr.mxu0 0.0
    %1164 = vmatpush2.xpose.msra.mxu0 0.0
    %1165 = vmatprep.subr.mxu0 0.0
    %1166 = vmatpush2.xpose.msra.mxu0 0.0
    %1167 = vmatprep.subr.mxu0 0.0
    %1168 = vmatpush2.xpose.msra.mxu0 0.0
    %1169 = vmatprep.subr.mxu0 0.0
    %1170 = vmatpush2.xpose.msra.mxu0 0.0
    %1171 = vmatprep.subr.mxu0 0.0
    %1172 = vmatpush2.xpose.msra.mxu0 0.0
    %1173 = vmatprep.mubr.f32.mxu0 0.0
    %1174 = vmatmul.mubr.f32.gmra.mxu0 %v73
    %v1175 = vpop.f32.mrf.mxu0
    %v1176 = vadd.f32 0.0, %v1175
    %v1177 = vpop.f32.mrf.mxu0
    %1178 = vmatprep.mubr.f32.mxu0 0.0
    %1179 = vmatmul.mubr.f32.gmra.mxu0 %v76
    %v1180 = vpop.f32.mrf.mxu0
    %v1181 = vadd.f32 0.0, %v1180
    %v1182 = vpop.f32.mrf.mxu0
    %1183 = vmatprep.mubr.f32.mxu0 0.0
    %1184 = vmatmul.mubr.f32.gmra.mxu0 %v79
    %v1185 = vpop.f32.mrf.mxu0
    %v1186 = vadd.f32 0.0, %v1185
    %v1187 = vpop.f32.mrf.mxu0
    %1188 = vmatprep.mubr.f32.mxu0 0.0
    %1189 = vmatmul.mubr.f32.gmra.mxu0 %v82
    %v1190 = vpop.f32.mrf.mxu0
    %v1191 = vadd.f32 0.0, %v1190
    %v1192 = vpop.f32.mrf.mxu0
    %1193 = vdwg.mxu0
    %v1194 = vmul.f32 %v1176, 0.0625
    %v1195 = vmul.f32 %v1181, 0.0625
    %v1196 = vmul.f32 %v1186, 0.0625
    %v1197 = vmul.f32 %v1191, 0.0625
    %v1198 = vtanh.pop %v1194
    %v1199 = vtanh.pop %v1195
    %v1200 = vtanh.pop %v1196
    %v1201 = vtanh.pop %v1197
    %1202 = vst.msk [vmem:[#allocation4] sm:$0xff] %vm291, %v1198
    %1203 = vst.msk [vmem:[#allocation4 + $0x8] sm:$0xff] %vm291, %v1199
    %1204 = vst.msk [vmem:[#allocation4 + $0x10] sm:$0xff] %vm291, %v1200
    %1205 = vst.msk [vmem:[#allocation4 + $0x18] sm:$0xff] %vm291, %v1201
    %1206 = vmatprep.subr.mxu0 0.0
    %1207 = vmatpush1.xpose.msra.mxu0 0.0
    %1208 = vmatprep.subr.mxu0 0.0
    %1209 = vmatpush1.xpose.msra.mxu0 0.0
    %1210 = vmatprep.subr.mxu0 0.0
    %1211 = vmatpush1.xpose.msra.mxu0 0.0
    %1212 = vmatprep.subr.mxu0 0.0
    %1213 = vmatpush1.xpose.msra.mxu0 0.0
    %1214 = vmatprep.subr.mxu0 0.0
    %1215 = vmatpush1.xpose.msra.mxu0 0.0
    %1216 = vmatprep.subr.mxu0 0.0
    %1217 = vmatpush1.xpose.msra.mxu0 0.0
    %1218 = vmatprep.subr.mxu0 0.0
    %1219 = vmatpush1.xpose.msra.mxu0 0.0
    %1220 = vmatprep.subr.mxu0 0.0
    %1221 = vmatpush1.xpose.msra.mxu0 0.0
    %1222 = vmatprep.subr.mxu0 0.0
    %1223 = vmatpush1.xpose.msra.mxu0 0.0
    %1224 = vmatprep.subr.mxu0 0.0
    %1225 = vmatpush1.xpose.msra.mxu0 0.0
    %1226 = vmatprep.subr.mxu0 0.0
    %1227 = vmatpush1.xpose.msra.mxu0 0.0
    %1228 = vmatprep.subr.mxu0 0.0
    %1229 = vmatpush1.xpose.msra.mxu0 0.0
    %1230 = vmatprep.subr.mxu0 0.0
    %1231 = vmatpush1.xpose.msra.mxu0 %v179
    %1232 = vmatprep.subr.mxu0 0.0
    %1233 = vmatpush1.xpose.msra.mxu0 %v176
    %1234 = vmatprep.subr.mxu0 0.0
    %1235 = vmatpush1.xpose.msra.mxu0 %v173
    %1236 = vmatprep.subr.mxu0 0.0
    %1237 = vmatpush1.xpose.msra.mxu0 %v170
    %1238 = vmatprep.subr.mxu0 0.0
    %1239 = vmatpush2.xpose.msra.mxu0 0.0
    %1240 = vmatprep.subr.mxu0 0.0
    %1241 = vmatpush2.xpose.msra.mxu0 0.0
    %1242 = vmatprep.subr.mxu0 0.0
    %1243 = vmatpush2.xpose.msra.mxu0 0.0
    %1244 = vmatprep.subr.mxu0 0.0
    %1245 = vmatpush2.xpose.msra.mxu0 0.0
    %1246 = vmatprep.subr.mxu0 0.0
    %1247 = vmatpush2.xpose.msra.mxu0 0.0
    %1248 = vmatprep.subr.mxu0 0.0
    %1249 = vmatpush2.xpose.msra.mxu0 0.0
    %1250 = vmatprep.subr.mxu0 0.0
    %1251 = vmatpush2.xpose.msra.mxu0 0.0
    %1252 = vmatprep.subr.mxu0 0.0
    %1253 = vmatpush2.xpose.msra.mxu0 0.0
    %1254 = vmatprep.subr.mxu0 0.0
    %1255 = vmatpush2.xpose.msra.mxu0 0.0
    %1256 = vmatprep.subr.mxu0 0.0
    %1257 = vmatpush2.xpose.msra.mxu0 0.0
    %1258 = vmatprep.subr.mxu0 0.0
    %1259 = vmatpush2.xpose.msra.mxu0 0.0
    %1260 = vmatprep.subr.mxu0 0.0
    %1261 = vmatpush2.xpose.msra.mxu0 0.0
    %1262 = vmatprep.subr.mxu0 0.0
    %1263 = vmatpush2.xpose.msra.mxu0 0.0
    %1264 = vmatprep.subr.mxu0 0.0
    %1265 = vmatpush2.xpose.msra.mxu0 0.0
    %1266 = vmatprep.subr.mxu0 0.0
    %1267 = vmatpush2.xpose.msra.mxu0 0.0
    %1268 = vmatprep.subr.mxu0 0.0
    %1269 = vmatpush2.xpose.msra.mxu0 0.0
    %1270 = vmatprep.mubr.f32.mxu0 0.0
    %1271 = vmatmul.mubr.f32.gmra.mxu0 %v170
    %v1272 = vpop.f32.mrf.mxu0
    %v1273 = vadd.f32 0.0, %v1272
    %v1274 = vpop.f32.mrf.mxu0
    %1275 = vmatprep.mubr.f32.mxu0 0.0
    %1276 = vmatmul.mubr.f32.gmra.mxu0 %v173
    %v1277 = vpop.f32.mrf.mxu0
    %v1278 = vadd.f32 0.0, %v1277
    %v1279 = vpop.f32.mrf.mxu0
    %1280 = vmatprep.mubr.f32.mxu0 0.0
    %1281 = vmatmul.mubr.f32.gmra.mxu0 %v176
    %v1282 = vpop.f32.mrf.mxu0
    %v1283 = vadd.f32 0.0, %v1282
    %v1284 = vpop.f32.mrf.mxu0
    %1285 = vmatprep.mubr.f32.mxu0 0.0
    %1286 = vmatmul.mubr.f32.gmra.mxu0 %v179
    %v1287 = vpop.f32.mrf.mxu0
    %v1288 = vadd.f32 0.0, %v1287
    %v1289 = vpop.f32.mrf.mxu0
    %1290 = vdwg.mxu0
    %v1291 = vmul.f32 %v1273, 0.0625
    %v1292 = vmul.f32 %v1278, 0.0625
    %v1293 = vmul.f32 %v1283, 0.0625
    %v1294 = vmul.f32 %v1288, 0.0625
    %v1295 = vtanh.pop %v1291
    %v1296 = vtanh.pop %v1292
    %v1297 = vtanh.pop %v1293
    %v1298 = vtanh.pop %v1294
    %s1299 = scalar_lea.vmem [#allocation4], 32
    %1300 = vst.msk [vmem:[%s1299] sm:$0xff] %vm291, %v1295
    %1301 = vst.msk [vmem:[%s1299 + $0x8] sm:$0xff] %vm291, %v1296
    %1302 = vst.msk [vmem:[%s1299 + $0x10] sm:$0xff] %vm291, %v1297
    %1303 = vst.msk [vmem:[%s1299 + $0x18] sm:$0xff] %vm291, %v1298
    // Predicated region
    $region70: #{mcdis_forward.1} parent=1 // pred_check
      _
    $region71: #{mcdis_forward.1} parent=1 // pred_check_branch
      %1305 = sbr.rel (0) target = $region73
    $region72: #{mcdis_forward.1} parent=1 // pred_region
      %s1307 = ssub.s32 32, 32
      %1308 = vsyncadd [#allocation3], %s1307
      %s1310 = sshll.u32 [#allocation2], 4
      %s1311 = int_to_ptr.vmem [resolvable:$true] %s1310
      %1313 = dma.vmem_to_hbm [thread:$0]  %s1311, 32, %s17, [#allocation3]
    $region73: #{mcdis_forward.1} parent=1 // pred_fallthru
      _
    // Predicated region
    $region74: #{mcdis_forward.1} parent=1 // pred_check
      _
    $region75: #{mcdis_forward.1} parent=1 // pred_check_branch
      %1315 = sbr.rel (0) target = $region77
    $region76: #{mcdis_forward.1} parent=1 // pred_region
      _
    $region77: #{mcdis_forward.1} parent=1 // pred_fallthru
      _
    // Predicated region
    $region78: #{mcdis_forward.1} parent=1 // pred_check
      _
    $region79: #{mcdis_forward.1} parent=1 // pred_check_branch
      %1317 = sbr.rel (0) target = $region81
    $region80: #{mcdis_forward.1} parent=1 // pred_region
      %s1319 = ssub.s32 1024, 1024
      %1320 = vsyncadd [#allocation5], %s1319
      %s1321 = sshll.u32 [#allocation4], 4
      %s1322 = int_to_ptr.vmem [resolvable:$true] %s1321
      %1327 = dma.vmem_to_hbm [thread:$0]  %s1322, 1024, %s19, [#allocation5], 128, 128, 8
    $region81: #{mcdis_forward.1} parent=1 // pred_fallthru
      _
    // Predicated region
    $region82: #{mcdis_forward.1} parent=1 // pred_check
      _
    $region83: #{mcdis_forward.1} parent=1 // pred_check_branch
      %1329 = sbr.rel (0) target = $region85
    $region84: #{mcdis_forward.1} parent=1 // pred_region
      %1330 = dma.done [#allocation3], 32
    $region85: #{mcdis_forward.1} parent=1 // pred_fallthru
      _
    // Predicated region
    $region86: #{mcdis_forward.1} parent=1 // pred_check
      _
    $region87: #{mcdis_forward.1} parent=1 // pred_check_branch
      %1332 = sbr.rel (0) target = $region89
    $region88: #{mcdis_forward.1} parent=1 // pred_region
      _
    $region89: #{mcdis_forward.1} parent=1 // pred_fallthru
      _
    // Predicated region
    $region90: #{mcdis_forward.1} parent=1 // pred_check
      _
    $region91: #{mcdis_forward.1} parent=1 // pred_check_branch
      %1334 = sbr.rel (0) target = $region93
    $region92: #{mcdis_forward.1} parent=1 // pred_region
      %1335 = dma.done [#allocation5], 1024
    $region93: #{mcdis_forward.1} parent=1 // pred_fallthru
      _
    %1336 = vsyncpa [#allocation3], 1
    %1337 = vsyncpa [#allocation5], 1

</llo_original>
